<compile_context>
chip_gen: v6e
topology: v6e:2x2x1
jax: 0.10.0
libtpu: 0.0.40
codegen_flags: <defaults>
</compile_context>

<pallas_src>
import functools

import jax
import jax.numpy as jnp
from jax import lax
from jax.experimental import pallas as pl
from jax.experimental.pallas import tpu as pltpu

_TAPS = tuple((dy, dx) for dy in (-1, 0, 1) for dx in (-1, 0, 1))
_CENTER = 4  # index of (0, 0) in _TAPS


def _leaky_relu(x, slope=0.01):
    return jnp.where(x > 0, x, slope * x)


def residual_block_kernel(x_ref, w1_ref, b1_ref, w2_ref, b2_ref, m_ref, o_ref,
                          *, H, W, C1, C2, res_scale):
    HW = H * W
    x = x_ref[0]                                            # (C1, HW) f32, lane-dense

    # ---- layer1: 1x1 conv (BN scale folded into w1) + bias + LeakyReLU
    h1 = jnp.dot(w1_ref[...], x, preferred_element_type=jnp.float32)    # (C2, HW)
    h1 = _leaky_relu(h1 + b1_ref[...])

    # ---- layer2: 3x3 "same" conv as 9 lane-rolled taps + boundary masks + matmuls
    # Centre tap needs no roll/mask: use it to initialize the accumulator.
    acc = jnp.dot(w2_ref[_CENTER], h1, preferred_element_type=jnp.float32)  # (C1, HW)
    for t, (dy, dx) in enumerate(_TAPS):
        if dy == 0 and dx == 0:
            continue
        shift = (-(dy * W + dx)) % HW                       # static python int
        tap = pltpu.roll(h1, shift, axis=1) * m_ref[t]      # zero out-of-image taps
        acc = acc + jnp.dot(w2_ref[t], tap, preferred_element_type=jnp.float32)
    out = _leaky_relu(acc + b2_ref[...])                    # (C1, HW)

    # ---- fused residual add(s): + x, and + x again when shortcut (== + 2x)
    o_ref[0] = (out + res_scale * x).astype(o_ref.dtype)


def residual_block_pallas(x_nchw, kernel_params, shortcut=True):
    """x_nchw: (N, C1, H, W) float32 (PyTorch layout). Returns (N, C1, H, W)."""
    N, C1, H, W = x_nchw.shape
    C2 = C1 // 2
    HW = H * W
    w1s, b1, w2s, b2, masks = kernel_params

    # Free reshape (NCHW is contiguous) — no transposes anywhere.
    x = x_nchw.astype(jnp.float32).reshape(N, C1, HW)

    kernel = functools.partial(
        residual_block_kernel, H=H, W=W, C1=C1, C2=C2,
        res_scale=2.0 if shortcut else 1.0)

    out = pl.pallas_call(
        kernel,
        out_shape=jax.ShapeDtypeStruct((N, C1, HW), jnp.float32),
        grid=(N,),
        in_specs=[
            pl.BlockSpec((1, C1, HW), lambda n: (n, 0, 0)),    # x (one image)
            pl.BlockSpec((C2, C1), lambda n: (0, 0)),          # w1 * bn1_scale
            pl.BlockSpec((C2, 1), lambda n: (0, 0)),           # bn1 bias
            pl.BlockSpec((9, C1, C2), lambda n: (0, 0, 0)),    # w2 * bn2_scale, per tap
            pl.BlockSpec((C1, 1), lambda n: (0, 0)),           # bn2 bias
            pl.BlockSpec((9, 1, HW), lambda n: (0, 0, 0)),     # boundary masks
        ],
        out_specs=pl.BlockSpec((1, C1, HW), lambda n: (n, 0, 0)),
        compiler_params=pltpu.CompilerParams(
            dimension_semantics=("parallel",)),
    )(x, w1s, b1, w2s, b2, masks)

    return out.reshape(N, C1, H, W)


# ----------------------------------------------------------------------------
# Parameter construction (PyTorch weight shapes) + repack for the kernel
# ----------------------------------------------------------------------------
def init_torch_style_params(key, c1):
    c2 = c1 // 2
    ks = jax.random.split(key, 10)
    w1 = 0.2 * jax.random.normal(ks[0], (c2, c1, 1, 1), jnp.float32)   # OIHW
    g1 = 1.0 + 0.1 * jax.random.normal(ks[1], (c2,), jnp.float32)
    b1 = 0.1 * jax.random.normal(ks[2], (c2,), jnp.float32)
    m1 = 0.1 * jax.random.normal(ks[3], (c2,), jnp.float32)
    v1 = jax.random.uniform(ks[4], (c2,), jnp.float32, 0.5, 1.5)
    w2 = 0.1 * jax.random.normal(ks[5], (c1, c2, 3, 3), jnp.float32)   # OIHW
    g2 = 1.0 + 0.1 * jax.random.normal(ks[6], (c1,), jnp.float32)
    b2 = 0.1 * jax.random.normal(ks[7], (c1,), jnp.float32)
    m2 = 0.1 * jax.random.normal(ks[8], (c1,), jnp.float32)
    v2 = jax.random.uniform(ks[9], (c1,), jnp.float32, 0.5, 1.5)
    return (w1, g1, b1, m1, v1, w2, g2, b2, m2, v2)


def make_boundary_masks(H, W):
    """Per-tap validity masks over the flattened H*W (lane) axis, (9, 1, H*W)."""
    hh = jnp.arange(H)[:, None]
    ww = jnp.arange(W)[None, :]
    ms = []
    for dy, dx in _TAPS:
        ok = ((hh + dy >= 0) & (hh + dy < H) & (ww + dx >= 0) & (ww + dx < W))
        ms.append(ok.reshape(1, H * W).astype(jnp.float32))
    return jnp.stack(ms, axis=0)


def repack_for_kernel(tp, H, W, eps=1e-5):
    w1, g1, b1, m1, v1, w2, g2, b2, m2, v2 = tp
    s1 = g1 / jnp.sqrt(v1 + eps)
    s2 = g2 / jnp.sqrt(v2 + eps)
    # 1x1 conv: fold BN scale into the (C2, C1) weight matrix.
    w1s = w1[:, :, 0, 0] * s1[:, None]
    b1k = (b1 - m1 * s1)[:, None]                           # (C2, 1)
    # 3x3 conv: fold BN scale, repack OIHW -> (tap, C1_out, C2_in).
    c1, c2 = w2.shape[0], w2.shape[1]
    w2s = jnp.transpose(w2 * s2[:, None, None, None], (2, 3, 0, 1)).reshape(9, c1, c2)
    b2k = (b2 - m2 * s2)[:, None]                           # (C1, 1)
    masks = make_boundary_masks(H, W)                       # (9, 1, H*W)
    return (w1s, b1k, w2s, b2k, masks)


def reference_jax(x, tp, shortcut=True, eps=1e-5):
    """Pure-JAX NCHW reference mirroring the PyTorch module (eval-mode BN)."""
    w1, g1, b1, m1, v1, w2, g2, b2, m2, v2 = tp

    def conv_bn_act(x, w, g, b, m, v, pad):
        y = lax.conv_general_dilated(
            x, w, (1, 1), [(pad, pad), (pad, pad)],
            dimension_numbers=('NCHW', 'OIHW', 'NCHW'))
        s = g / jnp.sqrt(v + eps)
        y = y * s[None, :, None, None] + (b - m * s)[None, :, None, None]
        return jnp.where(y > 0, y, 0.01 * y)

    out = conv_bn_act(x, w1, g1, b1, m1, v1, 0)
    out = conv_bn_act(out, w2, g2, b2, m2, v2, 1)
    out = out + x
    if shortcut:
        out = out + x
    return out


if __name__ == "__main__":
    key = jax.random.PRNGKey(0)
    kx, kp = jax.random.split(key)

    N, C1, H, W = 2, 8, 16, 16
    x = jax.random.normal(kx, (N, C1, H, W), jnp.float32)

    torch_params = init_torch_style_params(kp, C1)
    kernel_params = repack_for_kernel(torch_params, H, W)

    out = residual_block_pallas(x, kernel_params, shortcut=True)
    out = jax.block_until_ready(out)

    ref = reference_jax(x, torch_params, shortcut=True)
    assert out.shape == (N, C1, H, W)
    err = float(jnp.max(jnp.abs(out - ref)))
    assert err < 1e-4, f"mismatch vs JAX reference: {err}"

    print("KERNEL_OK")
</pallas_src>

<mosaic_0001>
module attributes {stable_mosaic.version = 11 : i64} {
  func.func @residual_block_kernel(%arg0: i32, %arg1: memref<1x8x256xf32, #tpu.memory_space<vmem>>, %arg2: memref<4x8xf32, #tpu.memory_space<vmem>>, %arg3: memref<4x1xf32, #tpu.memory_space<vmem>>, %arg4: memref<9x8x4xf32, #tpu.memory_space<vmem>>, %arg5: memref<8x1xf32, #tpu.memory_space<vmem>>, %arg6: memref<9x1x256xf32, #tpu.memory_space<vmem>>, %arg7: memref<1x8x256xf32, #tpu.memory_space<vmem>>) attributes {dimension_semantics = [#tpu.dimension_semantics<parallel>], iteration_bounds = array<i64: 2>, scalar_prefetch = 0 : i64, scratch_operands = 0 : i64, tpu.core_type = #tpu.core_type<tc>, window_params = [{transform_indices = @transform_0, window_bounds = array<i64: 1, 8, 256>}, {pipeline_mode = #tpu.pipeline_mode<synchronous>, transform_indices = @transform_1, window_bounds = array<i64: 4, 8>}, {pipeline_mode = #tpu.pipeline_mode<synchronous>, transform_indices = @transform_2, window_bounds = array<i64: 4, 1>}, {pipeline_mode = #tpu.pipeline_mode<synchronous>, transform_indices = @transform_3, window_bounds = array<i64: 9, 8, 4>}, {pipeline_mode = #tpu.pipeline_mode<synchronous>, transform_indices = @transform_4, window_bounds = array<i64: 8, 1>}, {pipeline_mode = #tpu.pipeline_mode<synchronous>, transform_indices = @transform_5, window_bounds = array<i64: 9, 1, 256>}, {transform_indices = @transform_6, window_bounds = array<i64: 1, 8, 256>}]} {
    %c0 = arith.constant 0 : index
    %c0_0 = arith.constant 0 : index
    %c0_1 = arith.constant 0 : index
    %0 = vector.load %arg1[%c0, %c0_0, %c0_1] : memref<1x8x256xf32, #tpu.memory_space<vmem>>, vector<1x8x256xf32>
    %1 = vector.shape_cast %0 : vector<1x8x256xf32> to vector<8x256xf32>
    %c0_2 = arith.constant 0 : index
    %c0_3 = arith.constant 0 : index
    %2 = vector.load %arg2[%c0_2, %c0_3] : memref<4x8xf32, #tpu.memory_space<vmem>>, vector<4x8xf32>
    %cst = arith.constant dense<0.000000e+00> : vector<4x256xf32>
    %3 = tpu.matmul %2, %1, %cst {dimension_numbers = #tpu.dot_dimension_numbers<[1], [0], [0], [1], [0, 0, 1, 1], [], []>} : vector<4x8xf32>, vector<8x256xf32>, vector<4x256xf32> -> vector<4x256xf32>
    %c0_4 = arith.constant 0 : index
    %c0_5 = arith.constant 0 : index
    %4 = vector.load %arg3[%c0_4, %c0_5] : memref<4x1xf32, #tpu.memory_space<vmem>>, vector<4x1xf32>
    %5 = vector.broadcast %4 : vector<4x1xf32> to vector<4x256xf32>
    %6 = arith.addf %3, %5 : vector<4x256xf32>
    %cst_6 = arith.constant 0.000000e+00 : f32
    %7 = vector.broadcast %cst_6 : f32 to vector<4x256xf32>
    %8 = arith.cmpf ogt, %6, %7 : vector<4x256xf32>
    %cst_7 = arith.constant 0.00999999977 : f32
    %9 = vector.broadcast %cst_7 : f32 to vector<4x256xf32>
    %10 = arith.mulf %9, %6 : vector<4x256xf32>
    %11 = arith.select %8, %6, %10 : vector<4x256xi1>, vector<4x256xf32>
    %c4 = arith.constant 4 : index
    %c0_8 = arith.constant 0 : index
    %c0_9 = arith.constant 0 : index
    %12 = vector.load %arg4[%c4, %c0_8, %c0_9] : memref<9x8x4xf32, #tpu.memory_space<vmem>>, vector<1x8x4xf32>
    %13 = vector.shape_cast %12 : vector<1x8x4xf32> to vector<8x4xf32>
    %cst_10 = arith.constant dense<0.000000e+00> : vector<8x256xf32>
    %14 = tpu.matmul %13, %11, %cst_10 {dimension_numbers = #tpu.dot_dimension_numbers<[1], [0], [0], [1], [0, 0, 1, 1], [], []>} : vector<8x4xf32>, vector<4x256xf32>, vector<8x256xf32> -> vector<8x256xf32>
    %c17_i32 = arith.constant 17 : i32
    %15 = tpu.dynamic_rotate %11 by %c17_i32 dim 1 : vector<4x256xf32>, i32 -> vector<4x256xf32>
    %c0_11 = arith.constant 0 : index
    %c0_12 = arith.constant 0 : index
    %c0_13 = arith.constant 0 : index
    %16 = vector.load %arg6[%c0_11, %c0_12, %c0_13] : memref<9x1x256xf32, #tpu.memory_space<vmem>>, vector<1x1x256xf32>
    %17 = vector.shape_cast %16 : vector<1x1x256xf32> to vector<1x256xf32>
    %18 = vector.broadcast %17 : vector<1x256xf32> to vector<4x256xf32>
    %19 = arith.mulf %15, %18 : vector<4x256xf32>
    %c0_14 = arith.constant 0 : index
    %c0_15 = arith.constant 0 : index
    %c0_16 = arith.constant 0 : index
    %20 = vector.load %arg4[%c0_14, %c0_15, %c0_16] : memref<9x8x4xf32, #tpu.memory_space<vmem>>, vector<1x8x4xf32>
    %21 = vector.shape_cast %20 : vector<1x8x4xf32> to vector<8x4xf32>
    %cst_17 = arith.constant dense<0.000000e+00> : vector<8x256xf32>
    %22 = tpu.matmul %21, %19, %cst_17 {dimension_numbers = #tpu.dot_dimension_numbers<[1], [0], [0], [1], [0, 0, 1, 1], [], []>} : vector<8x4xf32>, vector<4x256xf32>, vector<8x256xf32> -> vector<8x256xf32>
    %23 = arith.addf %14, %22 : vector<8x256xf32>
    %c16_i32 = arith.constant 16 : i32
    %24 = tpu.dynamic_rotate %11 by %c16_i32 dim 1 : vector<4x256xf32>, i32 -> vector<4x256xf32>
    %c1 = arith.constant 1 : index
    %c0_18 = arith.constant 0 : index
    %c0_19 = arith.constant 0 : index
    %25 = vector.load %arg6[%c1, %c0_18, %c0_19] : memref<9x1x256xf32, #tpu.memory_space<vmem>>, vector<1x1x256xf32>
    %26 = vector.shape_cast %25 : vector<1x1x256xf32> to vector<1x256xf32>
    %27 = vector.broadcast %26 : vector<1x256xf32> to vector<4x256xf32>
    %28 = arith.mulf %24, %27 : vector<4x256xf32>
    %c1_20 = arith.constant 1 : index
    %c0_21 = arith.constant 0 : index
    %c0_22 = arith.constant 0 : index
    %29 = vector.load %arg4[%c1_20, %c0_21, %c0_22] : memref<9x8x4xf32, #tpu.memory_space<vmem>>, vector<1x8x4xf32>
    %30 = vector.shape_cast %29 : vector<1x8x4xf32> to vector<8x4xf32>
    %cst_23 = arith.constant dense<0.000000e+00> : vector<8x256xf32>
    %31 = tpu.matmul %30, %28, %cst_23 {dimension_numbers = #tpu.dot_dimension_numbers<[1], [0], [0], [1], [0, 0, 1, 1], [], []>} : vector<8x4xf32>, vector<4x256xf32>, vector<8x256xf32> -> vector<8x256xf32>
    %32 = arith.addf %23, %31 : vector<8x256xf32>
    %c15_i32 = arith.constant 15 : i32
    %33 = tpu.dynamic_rotate %11 by %c15_i32 dim 1 : vector<4x256xf32>, i32 -> vector<4x256xf32>
    %c2 = arith.constant 2 : index
    %c0_24 = arith.constant 0 : index
    %c0_25 = arith.constant 0 : index
    %34 = vector.load %arg6[%c2, %c0_24, %c0_25] : memref<9x1x256xf32, #tpu.memory_space<vmem>>, vector<1x1x256xf32>
    %35 = vector.shape_cast %34 : vector<1x1x256xf32> to vector<1x256xf32>
    %36 = vector.broadcast %35 : vector<1x256xf32> to vector<4x256xf32>
    %37 = arith.mulf %33, %36 : vector<4x256xf32>
    %c2_26 = arith.constant 2 : index
    %c0_27 = arith.constant 0 : index
    %c0_28 = arith.constant 0 : index
    %38 = vector.load %arg4[%c2_26, %c0_27, %c0_28] : memref<9x8x4xf32, #tpu.memory_space<vmem>>, vector<1x8x4xf32>
    %39 = vector.shape_cast %38 : vector<1x8x4xf32> to vector<8x4xf32>
    %cst_29 = arith.constant dense<0.000000e+00> : vector<8x256xf32>
    %40 = tpu.matmul %39, %37, %cst_29 {dimension_numbers = #tpu.dot_dimension_numbers<[1], [0], [0], [1], [0, 0, 1, 1], [], []>} : vector<8x4xf32>, vector<4x256xf32>, vector<8x256xf32> -> vector<8x256xf32>
    %41 = arith.addf %32, %40 : vector<8x256xf32>
    %c1_i32 = arith.constant 1 : i32
    %42 = tpu.dynamic_rotate %11 by %c1_i32 dim 1 : vector<4x256xf32>, i32 -> vector<4x256xf32>
    %c3 = arith.constant 3 : index
    %c0_30 = arith.constant 0 : index
    %c0_31 = arith.constant 0 : index
    %43 = vector.load %arg6[%c3, %c0_30, %c0_31] : memref<9x1x256xf32, #tpu.memory_space<vmem>>, vector<1x1x256xf32>
    %44 = vector.shape_cast %43 : vector<1x1x256xf32> to vector<1x256xf32>
    %45 = vector.broadcast %44 : vector<1x256xf32> to vector<4x256xf32>
    %46 = arith.mulf %42, %45 : vector<4x256xf32>
    %c3_32 = arith.constant 3 : index
    %c0_33 = arith.constant 0 : index
    %c0_34 = arith.constant 0 : index
    %47 = vector.load %arg4[%c3_32, %c0_33, %c0_34] : memref<9x8x4xf32, #tpu.memory_space<vmem>>, vector<1x8x4xf32>
    %48 = vector.shape_cast %47 : vector<1x8x4xf32> to vector<8x4xf32>
    %cst_35 = arith.constant dense<0.000000e+00> : vector<8x256xf32>
    %49 = tpu.matmul %48, %46, %cst_35 {dimension_numbers = #tpu.dot_dimension_numbers<[1], [0], [0], [1], [0, 0, 1, 1], [], []>} : vector<8x4xf32>, vector<4x256xf32>, vector<8x256xf32> -> vector<8x256xf32>
    %50 = arith.addf %41, %49 : vector<8x256xf32>
    %c255_i32 = arith.constant 255 : i32
    %51 = tpu.dynamic_rotate %11 by %c255_i32 dim 1 : vector<4x256xf32>, i32 -> vector<4x256xf32>
    %c5 = arith.constant 5 : index
    %c0_36 = arith.constant 0 : index
    %c0_37 = arith.constant 0 : index
    %52 = vector.load %arg6[%c5, %c0_36, %c0_37] : memref<9x1x256xf32, #tpu.memory_space<vmem>>, vector<1x1x256xf32>
    %53 = vector.shape_cast %52 : vector<1x1x256xf32> to vector<1x256xf32>
    %54 = vector.broadcast %53 : vector<1x256xf32> to vector<4x256xf32>
    %55 = arith.mulf %51, %54 : vector<4x256xf32>
    %c5_38 = arith.constant 5 : index
    %c0_39 = arith.constant 0 : index
    %c0_40 = arith.constant 0 : index
    %56 = vector.load %arg4[%c5_38, %c0_39, %c0_40] : memref<9x8x4xf32, #tpu.memory_space<vmem>>, vector<1x8x4xf32>
    %57 = vector.shape_cast %56 : vector<1x8x4xf32> to vector<8x4xf32>
    %cst_41 = arith.constant dense<0.000000e+00> : vector<8x256xf32>
    %58 = tpu.matmul %57, %55, %cst_41 {dimension_numbers = #tpu.dot_dimension_numbers<[1], [0], [0], [1], [0, 0, 1, 1], [], []>} : vector<8x4xf32>, vector<4x256xf32>, vector<8x256xf32> -> vector<8x256xf32>
    %59 = arith.addf %50, %58 : vector<8x256xf32>
    %c241_i32 = arith.constant 241 : i32
    %60 = tpu.dynamic_rotate %11 by %c241_i32 dim 1 : vector<4x256xf32>, i32 -> vector<4x256xf32>
    %c6 = arith.constant 6 : index
    %c0_42 = arith.constant 0 : index
    %c0_43 = arith.constant 0 : index
    %61 = vector.load %arg6[%c6, %c0_42, %c0_43] : memref<9x1x256xf32, #tpu.memory_space<vmem>>, vector<1x1x256xf32>
    %62 = vector.shape_cast %61 : vector<1x1x256xf32> to vector<1x256xf32>
    %63 = vector.broadcast %62 : vector<1x256xf32> to vector<4x256xf32>
    %64 = arith.mulf %60, %63 : vector<4x256xf32>
    %c6_44 = arith.constant 6 : index
    %c0_45 = arith.constant 0 : index
    %c0_46 = arith.constant 0 : index
    %65 = vector.load %arg4[%c6_44, %c0_45, %c0_46] : memref<9x8x4xf32, #tpu.memory_space<vmem>>, vector<1x8x4xf32>
    %66 = vector.shape_cast %65 : vector<1x8x4xf32> to vector<8x4xf32>
    %cst_47 = arith.constant dense<0.000000e+00> : vector<8x256xf32>
    %67 = tpu.matmul %66, %64, %cst_47 {dimension_numbers = #tpu.dot_dimension_numbers<[1], [0], [0], [1], [0, 0, 1, 1], [], []>} : vector<8x4xf32>, vector<4x256xf32>, vector<8x256xf32> -> vector<8x256xf32>
    %68 = arith.addf %59, %67 : vector<8x256xf32>
    %c240_i32 = arith.constant 240 : i32
    %69 = tpu.dynamic_rotate %11 by %c240_i32 dim 1 : vector<4x256xf32>, i32 -> vector<4x256xf32>
    %c7 = arith.constant 7 : index
    %c0_48 = arith.constant 0 : index
    %c0_49 = arith.constant 0 : index
    %70 = vector.load %arg6[%c7, %c0_48, %c0_49] : memref<9x1x256xf32, #tpu.memory_space<vmem>>, vector<1x1x256xf32>
    %71 = vector.shape_cast %70 : vector<1x1x256xf32> to vector<1x256xf32>
    %72 = vector.broadcast %71 : vector<1x256xf32> to vector<4x256xf32>
    %73 = arith.mulf %69, %72 : vector<4x256xf32>
    %c7_50 = arith.constant 7 : index
    %c0_51 = arith.constant 0 : index
    %c0_52 = arith.constant 0 : index
    %74 = vector.load %arg4[%c7_50, %c0_51, %c0_52] : memref<9x8x4xf32, #tpu.memory_space<vmem>>, vector<1x8x4xf32>
    %75 = vector.shape_cast %74 : vector<1x8x4xf32> to vector<8x4xf32>
    %cst_53 = arith.constant dense<0.000000e+00> : vector<8x256xf32>
    %76 = tpu.matmul %75, %73, %cst_53 {dimension_numbers = #tpu.dot_dimension_numbers<[1], [0], [0], [1], [0, 0, 1, 1], [], []>} : vector<8x4xf32>, vector<4x256xf32>, vector<8x256xf32> -> vector<8x256xf32>
    %77 = arith.addf %68, %76 : vector<8x256xf32>
    %c239_i32 = arith.constant 239 : i32
    %78 = tpu.dynamic_rotate %11 by %c239_i32 dim 1 : vector<4x256xf32>, i32 -> vector<4x256xf32>
    %c8 = arith.constant 8 : index
    %c0_54 = arith.constant 0 : index
    %c0_55 = arith.constant 0 : index
    %79 = vector.load %arg6[%c8, %c0_54, %c0_55] : memref<9x1x256xf32, #tpu.memory_space<vmem>>, vector<1x1x256xf32>
    %80 = vector.shape_cast %79 : vector<1x1x256xf32> to vector<1x256xf32>
    %81 = vector.broadcast %80 : vector<1x256xf32> to vector<4x256xf32>
    %82 = arith.mulf %78, %81 : vector<4x256xf32>
    %c8_56 = arith.constant 8 : index
    %c0_57 = arith.constant 0 : index
    %c0_58 = arith.constant 0 : index
    %83 = vector.load %arg4[%c8_56, %c0_57, %c0_58] : memref<9x8x4xf32, #tpu.memory_space<vmem>>, vector<1x8x4xf32>
    %84 = vector.shape_cast %83 : vector<1x8x4xf32> to vector<8x4xf32>
    %cst_59 = arith.constant dense<0.000000e+00> : vector<8x256xf32>
    %85 = tpu.matmul %84, %82, %cst_59 {dimension_numbers = #tpu.dot_dimension_numbers<[1], [0], [0], [1], [0, 0, 1, 1], [], []>} : vector<8x4xf32>, vector<4x256xf32>, vector<8x256xf32> -> vector<8x256xf32>
    %86 = arith.addf %77, %85 : vector<8x256xf32>
    %c0_60 = arith.constant 0 : index
    %c0_61 = arith.constant 0 : index
    %87 = vector.load %arg5[%c0_60, %c0_61] : memref<8x1xf32, #tpu.memory_space<vmem>>, vector<8x1xf32>
    %88 = vector.broadcast %87 : vector<8x1xf32> to vector<8x256xf32>
    %89 = arith.addf %86, %88 : vector<8x256xf32>
    %cst_62 = arith.constant 0.000000e+00 : f32
    %90 = vector.broadcast %cst_62 : f32 to vector<8x256xf32>
    %91 = arith.cmpf ogt, %89, %90 : vector<8x256xf32>
    %cst_63 = arith.constant 0.00999999977 : f32
    %92 = vector.broadcast %cst_63 : f32 to vector<8x256xf32>
    %93 = arith.mulf %92, %89 : vector<8x256xf32>
    %94 = arith.select %91, %89, %93 : vector<8x256xi1>, vector<8x256xf32>
    %cst_64 = arith.constant 2.000000e+00 : f32
    %95 = vector.broadcast %cst_64 : f32 to vector<8x256xf32>
    %96 = arith.mulf %95, %1 : vector<8x256xf32>
    %97 = arith.addf %94, %96 : vector<8x256xf32>
    %c0_65 = arith.constant 0 : index
    %c0_66 = arith.constant 0 : index
    %c0_67 = arith.constant 0 : index
    %98 = vector.load %arg7[%c0_65, %c0_66, %c0_67] : memref<1x8x256xf32, #tpu.memory_space<vmem>>, vector<1x8x256xf32>
    %99 = vector.shape_cast %98 : vector<1x8x256xf32> to vector<8x256xf32>
    %100 = vector.shape_cast %97 : vector<8x256xf32> to vector<1x8x256xf32>
    tpu.vector_store %arg7[%c0_65, %c0_66, %c0_67], %100 {strides = array<i32>} : memref<1x8x256xf32, #tpu.memory_space<vmem>>, vector<1x8x256xf32>,
    return
  }
  func.func @transform_0(%arg0: i32) -> (i32, i32, i32) {
    %c0_i32 = arith.constant 0 : i32
    %c0_i32_0 = arith.constant 0 : i32
    %c0_i32_1 = arith.constant 0 : i32
    return %arg0, %c0_i32, %c0_i32_0 : i32, i32, i32
  }
  func.func @transform_1(%arg0: i32) -> (i32, i32) {
    %c0_i32 = arith.constant 0 : i32
    %c0_i32_0 = arith.constant 0 : i32
    %c0_i32_1 = arith.constant 0 : i32
    return %c0_i32, %c0_i32_0 : i32, i32
  }
  func.func @transform_2(%arg0: i32) -> (i32, i32) {
    %c0_i32 = arith.constant 0 : i32
    %c0_i32_0 = arith.constant 0 : i32
    %c0_i32_1 = arith.constant 0 : i32
    return %c0_i32, %c0_i32_0 : i32, i32
  }
  func.func @transform_3(%arg0: i32) -> (i32, i32, i32) {
    %c0_i32 = arith.constant 0 : i32
    %c0_i32_0 = arith.constant 0 : i32
    %c0_i32_1 = arith.constant 0 : i32
    %c0_i32_2 = arith.constant 0 : i32
    return %c0_i32, %c0_i32_0, %c0_i32_1 : i32, i32, i32
  }
  func.func @transform_4(%arg0: i32) -> (i32, i32) {
    %c0_i32 = arith.constant 0 : i32
    %c0_i32_0 = arith.constant 0 : i32
    %c0_i32_1 = arith.constant 0 : i32
    return %c0_i32, %c0_i32_0 : i32, i32
  }
  func.func @transform_5(%arg0: i32) -> (i32, i32, i32) {
    %c0_i32 = arith.constant 0 : i32
    %c0_i32_0 = arith.constant 0 : i32
    %c0_i32_1 = arith.constant 0 : i32
    %c0_i32_2 = arith.constant 0 : i32
    return %c0_i32, %c0_i32_0, %c0_i32_1 : i32, i32, i32
  }
  func.func @transform_6(%arg0: i32) -> (i32, i32, i32) {
    %c0_i32 = arith.constant 0 : i32
    %c0_i32_0 = arith.constant 0 : i32
    %c0_i32_1 = arith.constant 0 : i32
    return %arg0, %c0_i32, %c0_i32_0 : i32, i32, i32
  }
}

</mosaic_0001>

<llo_original>
// kernel: tpu_custom_call.1
$region0: #{tpu_custom_call.1}
  #allocation0 [shape = 'u32[]', space=smem, size = 0x4, offset = 0x4, fixed_abs, tag = 'smem constant byte address 0x4 - core index']
  #allocation1 [shape = 'u32[144,128]{1,0:T(1,128)}', space=vmem, size = 0x12000, scoped, tag = 'internal scratch']
  %s0 = inlined_call_operand.vmem [shape: f32[2,8,256], index: 0, kind: input, shape index: {}]
  %s1 = inlined_call_operand.vmem [shape: f32[4,8], index: 1, kind: input, shape index: {}]
  %s2 = inlined_call_operand.vmem [shape: f32[4,1], index: 2, kind: input, shape index: {}]
  %s3 = inlined_call_operand.vmem [shape: f32[9,8,4], index: 3, kind: input, shape index: {}]
  %s4 = inlined_call_operand.vmem [shape: f32[8,1], index: 4, kind: input, shape index: {}]
  %s5 = inlined_call_operand.vmem [shape: f32[9,1,256], index: 5, kind: input, shape index: {}]
  %s6 = inlined_call_operand.hbm [shape: f32[2,8,256], index: 6, kind: output, shape index: {}]
  %s7 = sld [smem:[#allocation0]]
  $region57: #{tpu_custom_call.1} parent=0
    _
  %s9 = ssub.s32 1, %s7
  %s10 = scalar_select 0, %s9, %s7
  $region1: #{tpu_custom_call.1} parent=0
    #allocation2 [shape = 'u8[16384]{0}', space=vmem, size = 0x4000, scoped, tag = 'output window, operand 0']
    #allocation3 [shape = 's32[2]{0}', space=sflag, size = 0x8, scoped, tag = 'scoped memory for tpu_custom_call.1']
    %11 = vsyncpa [#allocation3], 0
    %s12 = scalar_lea.sflag [#allocation3], 1
    %13 = vsyncpa %s12, 0
    loop: start=0, step=1, limit=4
    $region2: #{tpu_custom_call.1} parent=1 // loop_pre_header
      _
    $region3: #{tpu_custom_call.1} parent=1 // loop_header
      %s15 = sphi 0, %s19
      %p16 = scmp.ge.s32.totalorder %s15, 4
      %s25 = sphi 0, %s27
      %s28 = sphi 0, %s25
      %s29 = sphi 0, %s28
      %s45 = sphi 0, %s29
      %s49 = sphi 0, %s49
      %s51 = sphi 0, %s49
      %s52 = sphi 0, %s51
      %s66 = sphi 0, %s52
      %s70 = sphi 0, %s70
      %s72 = sphi 0, %s70
      %s73 = sphi 0, %s72
      %s87 = sphi 0, %s73
      %s91 = sphi 0, %s91
      %s93 = sphi 0, %s91
      %s94 = sphi 0, %s93
      %s108 = sphi 0, %s94
      %s112 = sphi 0, %s112
      %s114 = sphi 0, %s112
      %s115 = sphi 0, %s114
      %s129 = sphi 0, %s115
      %s133 = sphi 0, %s133
      %s135 = sphi 0, %s133
      %s136 = sphi 0, %s135
      %s150 = sphi 0, %s136
      %s156 = sphi 0, %s158
      %s159 = sphi 0, %s156
      %s160 = sphi 0, %s159
      %s176 = sphi 0, %s160
    $region4: #{tpu_custom_call.1} parent=1 // loop_header_branch
      %18 = sbr.rel (%p16) target = $region8
    $region5: #{tpu_custom_call.1} parent=1 // loop_body
      %s20 = ssub.s32 %s15, 1
      %s21 = ssub.s32 %s15, 2
      %s22 = sadd.s32 %s15, 1
      %s23 = ssub.s32 %s15, %s22
      %p24 = scmp.eq.s32.totalorder %s23, 0
      %s26 = sadd.s32 %s25, 1
      %s27 = scalar_select %p24, %s25, %s26
      %p30 = pneg %p24
      %p31 = scmp.eq.s32.totalorder %s15, 1
      %p32 = por %p30, %p31
      %p33 = scmp.ne.s32.totalorder %s25, %s28
      %p34 = scmp.eq.s32.totalorder %s15, 0
      %p35 = por %p33, %p34
      %p36 = scmp.ne.s32.totalorder %s25, %s28
      %p37 = scmp.eq.s32.totalorder %s20, 1
      %p38 = por %p36, %p37
      %p39 = scmp.ne.s32.totalorder %s28, %s29
      %p40 = scmp.eq.s32.totalorder %s20, 0
      %p41 = por %p39, %p40
      %p42 = scmp.ne.s32.totalorder %s28, %s29
      %p43 = scmp.eq.s32.totalorder %s21, 1
      %p44 = por %p42, %p43
      %p46 = scmp.ne.s32.totalorder %s29, %s45
      %p47 = scmp.eq.s32.totalorder %s21, 0
      %p48 = por %p46, %p47
      %s50 = sadd.s32 %s49, 1
      %p53 = scmp.eq.s32.totalorder %s15, 1
      %p54 = scmp.ne.s32.totalorder %s49, %s51
      %p55 = scmp.eq.s32.totalorder %s15, 0
      %p56 = por %p54, %p55
      %p57 = scmp.ne.s32.totalorder %s49, %s51
      %p58 = scmp.eq.s32.totalorder %s20, 1
      %p59 = por %p57, %p58
      %p60 = scmp.ne.s32.totalorder %s51, %s52
      %p61 = scmp.eq.s32.totalorder %s20, 0
      %p62 = por %p60, %p61
      %p63 = scmp.ne.s32.totalorder %s51, %s52
      %p64 = scmp.eq.s32.totalorder %s21, 1
      %p65 = por %p63, %p64
      %p67 = scmp.ne.s32.totalorder %s52, %s66
      %p68 = scmp.eq.s32.totalorder %s21, 0
      %p69 = por %p67, %p68
      %s71 = sadd.s32 %s70, 1
      %p74 = scmp.eq.s32.totalorder %s15, 1
      %p75 = scmp.ne.s32.totalorder %s70, %s72
      %p76 = scmp.eq.s32.totalorder %s15, 0
      %p77 = por %p75, %p76
      %p78 = scmp.ne.s32.totalorder %s70, %s72
      %p79 = scmp.eq.s32.totalorder %s20, 1
      %p80 = por %p78, %p79
      %p81 = scmp.ne.s32.totalorder %s72, %s73
      %p82 = scmp.eq.s32.totalorder %s20, 0
      %p83 = por %p81, %p82
      %p84 = scmp.ne.s32.totalorder %s72, %s73
      %p85 = scmp.eq.s32.totalorder %s21, 1
      %p86 = por %p84, %p85
      %p88 = scmp.ne.s32.totalorder %s73, %s87
      %p89 = scmp.eq.s32.totalorder %s21, 0
      %p90 = por %p88, %p89
      %s92 = sadd.s32 %s91, 1
      %p95 = scmp.eq.s32.totalorder %s15, 1
      %p96 = scmp.ne.s32.totalorder %s91, %s93
      %p97 = scmp.eq.s32.totalorder %s15, 0
      %p98 = por %p96, %p97
      %p99 = scmp.ne.s32.totalorder %s91, %s93
      %p100 = scmp.eq.s32.totalorder %s20, 1
      %p101 = por %p99, %p100
      %p102 = scmp.ne.s32.totalorder %s93, %s94
      %p103 = scmp.eq.s32.totalorder %s20, 0
      %p104 = por %p102, %p103
      %p105 = scmp.ne.s32.totalorder %s93, %s94
      %p106 = scmp.eq.s32.totalorder %s21, 1
      %p107 = por %p105, %p106
      %p109 = scmp.ne.s32.totalorder %s94, %s108
      %p110 = scmp.eq.s32.totalorder %s21, 0
      %p111 = por %p109, %p110
      %s113 = sadd.s32 %s112, 1
      %p116 = scmp.eq.s32.totalorder %s15, 1
      %p117 = scmp.ne.s32.totalorder %s112, %s114
      %p118 = scmp.eq.s32.totalorder %s15, 0
      %p119 = por %p117, %p118
      %p120 = scmp.ne.s32.totalorder %s112, %s114
      %p121 = scmp.eq.s32.totalorder %s20, 1
      %p122 = por %p120, %p121
      %p123 = scmp.ne.s32.totalorder %s114, %s115
      %p124 = scmp.eq.s32.totalorder %s20, 0
      %p125 = por %p123, %p124
      %p126 = scmp.ne.s32.totalorder %s114, %s115
      %p127 = scmp.eq.s32.totalorder %s21, 1
      %p128 = por %p126, %p127
      %p130 = scmp.ne.s32.totalorder %s115, %s129
      %p131 = scmp.eq.s32.totalorder %s21, 0
      %p132 = por %p130, %p131
      %s134 = sadd.s32 %s133, 1
      %p137 = scmp.eq.s32.totalorder %s15, 1
      %p138 = scmp.ne.s32.totalorder %s133, %s135
      %p139 = scmp.eq.s32.totalorder %s15, 0
      %p140 = por %p138, %p139
      %p141 = scmp.ne.s32.totalorder %s133, %s135
      %p142 = scmp.eq.s32.totalorder %s20, 1
      %p143 = por %p141, %p142
      %p144 = scmp.ne.s32.totalorder %s135, %s136
      %p145 = scmp.eq.s32.totalorder %s20, 0
      %p146 = por %p144, %p145
      %p147 = scmp.ne.s32.totalorder %s135, %s136
      %p148 = scmp.eq.s32.totalorder %s21, 1
      %p149 = por %p147, %p148
      %p151 = scmp.ne.s32.totalorder %s136, %s150
      %p152 = scmp.eq.s32.totalorder %s21, 0
      %p153 = por %p151, %p152
      %s154 = ssub.s32 %s15, %s22
      %p155 = scmp.eq.s32.totalorder %s154, 0
      %s157 = sadd.s32 %s156, 1
      %s158 = scalar_select %p155, %s156, %s157
      %p161 = pneg %p155
      %p162 = scmp.eq.s32.totalorder %s15, 1
      %p163 = por %p161, %p162
      %p164 = scmp.ne.s32.totalorder %s156, %s159
      %p165 = scmp.eq.s32.totalorder %s15, 0
      %p166 = por %p164, %p165
      %p167 = scmp.ne.s32.totalorder %s156, %s159
      %p168 = scmp.eq.s32.totalorder %s20, 1
      %p169 = por %p167, %p168
      %p170 = scmp.ne.s32.totalorder %s159, %s160
      %p171 = scmp.eq.s32.totalorder %s20, 0
      %p172 = por %p170, %p171
      %p173 = scmp.ne.s32.totalorder %s159, %s160
      %p174 = scmp.eq.s32.totalorder %s21, 1
      %p175 = por %p173, %p174
      %p177 = scmp.ne.s32.totalorder %s160, %s176
      %p178 = scmp.eq.s32.totalorder %s21, 0
      %p179 = por %p177, %p178
      %p180 = scmp.le.s32.totalorder 1, %s15
      %p181 = scmp.lt.s32.totalorder %s15, 3
      %p182 = pnand %p180, %p181
      %p183 = pneg %p182
      // Predicated region
      $region9: #{tpu_custom_call.1} parent=5 // pred_check
        _
      $region10: #{tpu_custom_call.1} parent=5 // pred_check_branch
        %185 = sbr.rel (%p182) target = $region12
      $region11: #{tpu_custom_call.1} parent=5 // pred_region
        %s186 = ssub.s32 %s15, 1
        // Predicated region
        $region13: #{tpu_custom_call.1} parent=11 // pred_check
          %p187 = pneg %p62
        $region14: #{tpu_custom_call.1} parent=11 // pred_check_branch
          %189 = sbr.rel (%p187) target = $region16
        $region15: #{tpu_custom_call.1} parent=11 // pred_region
          _
        $region16: #{tpu_custom_call.1} parent=11 // pred_fallthru
          _
        // Predicated region
        $region17: #{tpu_custom_call.1} parent=11 // pred_check
          %p190 = pneg %p83
        $region18: #{tpu_custom_call.1} parent=11 // pred_check_branch
          %192 = sbr.rel (%p190) target = $region20
        $region19: #{tpu_custom_call.1} parent=11 // pred_region
          _
        $region20: #{tpu_custom_call.1} parent=11 // pred_fallthru
          _
        // Predicated region
        $region21: #{tpu_custom_call.1} parent=11 // pred_check
          %p193 = pneg %p104
        $region22: #{tpu_custom_call.1} parent=11 // pred_check_branch
          %195 = sbr.rel (%p193) target = $region24
        $region23: #{tpu_custom_call.1} parent=11 // pred_region
          _
        $region24: #{tpu_custom_call.1} parent=11 // pred_fallthru
          _
        // Predicated region
        $region25: #{tpu_custom_call.1} parent=11 // pred_check
          %p196 = pneg %p125
        $region26: #{tpu_custom_call.1} parent=11 // pred_check_branch
          %198 = sbr.rel (%p196) target = $region28
        $region27: #{tpu_custom_call.1} parent=11 // pred_region
          _
        $region28: #{tpu_custom_call.1} parent=11 // pred_fallthru
          _
        // Predicated region
        $region29: #{tpu_custom_call.1} parent=11 // pred_check
          %p199 = pneg %p146
        $region30: #{tpu_custom_call.1} parent=11 // pred_check_branch
          %201 = sbr.rel (%p199) target = $region32
        $region31: #{tpu_custom_call.1} parent=11 // pred_region
          _
        $region32: #{tpu_custom_call.1} parent=11 // pred_fallthru
          _
      $region12: #{tpu_custom_call.1} parent=5 // pred_fallthru
        _
      %p202 = scmp.lt.s32.totalorder %s15, 2
      // Predicated region
      $region33: #{tpu_custom_call.1} parent=5 // pred_check
        %p203 = pneg %p202
      $region34: #{tpu_custom_call.1} parent=5 // pred_check_branch
        %205 = sbr.rel (%p203) target = $region36
      $region35: #{tpu_custom_call.1} parent=5 // pred_region
        // Predicated region
        $region37: #{tpu_custom_call.1} parent=35 // pred_check
          %p206 = pneg %p35
        $region38: #{tpu_custom_call.1} parent=35 // pred_check_branch
          %208 = sbr.rel (%p206) target = $region40
        $region39: #{tpu_custom_call.1} parent=35 // pred_region
          %p209 = scmp.lt.s32.totalorder %s15, 1
          %s210 = scalar_select %p209, %s15, 1
          %s211 = smul.addr %s210, 2
          %s212 = smul.addr %s211, 8
          %s213 = scalar_lea.vmem %s0, %s212
        $region40: #{tpu_custom_call.1} parent=35 // pred_fallthru
          _
      $region36: #{tpu_custom_call.1} parent=5 // pred_fallthru
        _
      %p214 = scmp.le.s32.totalorder 1, %s15
      %p215 = scmp.lt.s32.totalorder %s15, 3
      %p216 = pnand %p214, %p215
      %p217 = pneg %p216
      // Predicated region
      $region41: #{tpu_custom_call.1} parent=5 // pred_check
        _
      $region42: #{tpu_custom_call.1} parent=5 // pred_check_branch
        %219 = sbr.rel (%p216) target = $region44
      $region43: #{tpu_custom_call.1} parent=5 // pred_region
        %s220 = ssub.s32 %s15, 1
        %p221 = scmp.lt.s32.totalorder %s20, 1
        %s222 = scalar_select %p221, %s20, 1
        %s223 = smul.addr %s222, 2
        %s224 = smul.addr %s223, 8
        %s225 = scalar_lea.vmem %s0, %s224
        %p226 = pneg %p41
        %p227 = pneg %p38
        %p228 = pneg %p62
        %p229 = pneg %p59
        %p230 = pneg %p83
        %p231 = pneg %p80
        %p232 = pneg %p104
        %p233 = pneg %p101
        %p234 = pneg %p125
        %p235 = pneg %p122
        %p236 = pneg %p146
        %p237 = pneg %p143
        %p238 = pneg %p172
        %p239 = pneg %p169
        %s240 = sand.u32 %s159, 1
        %s241 = scalar_lea.sflag [#allocation3], %s240
        %s242 = sand.u32 %s159, 1
        %s243 = smul.addr %s242, 16
        %s244 = scalar_lea.vmem [#allocation2], %s243
        %p245 = scmp.lt.s32.totalorder %s20, 1
        %s246 = scalar_select %p245, %s20, 1
        %s247 = smul.addr %s246, 2
        %s248 = smul.addr %s247, 8
        %s249 = scalar_lea.vmem %s0, %s248
        %v250 = vld [vmem:[%s249] sm:$0xff]
        %v251 = vld [vmem:[%s249 + $0x8] sm:$0xff]
        %v252 = vld [vmem:[%s1] sm:$0xf]
        %v253 = vld [vmem:[%s2] sm:$0xf]
        %255 = vset.pattern.permute.xlu0 0
        %256 = vperm.xlu0 %255, %v253
        %v257 = vpop.permute.xlu0 %256
        %vm259 = vcmask 64512
        %v261 = vsel %vm259, %v252, 0
        %263 = vmatprep.subr.mxu0 0.0
        %264 = vmatpush1.msra.mxu0 0.0
        %265 = vmatprep.subr.mxu0 0.0
        %266 = vmatpush1.msra.mxu0 0.0
        %267 = vmatprep.subr.mxu0 0.0
        %268 = vmatpush1.msra.mxu0 0.0
        %269 = vmatprep.subr.mxu0 0.0
        %270 = vmatpush1.msra.mxu0 0.0
        %271 = vmatprep.subr.mxu0 0.0
        %272 = vmatpush1.msra.mxu0 0.0
        %273 = vmatprep.subr.mxu0 0.0
        %274 = vmatpush1.msra.mxu0 0.0
        %275 = vmatprep.subr.mxu0 0.0
        %276 = vmatpush1.msra.mxu0 0.0
        %277 = vmatprep.subr.mxu0 0.0
        %278 = vmatpush1.msra.mxu0 0.0
        %279 = vmatprep.subr.mxu0 0.0
        %280 = vmatpush1.msra.mxu0 0.0
        %281 = vmatprep.subr.mxu0 0.0
        %282 = vmatpush1.msra.mxu0 0.0
        %283 = vmatprep.subr.mxu0 0.0
        %284 = vmatpush1.msra.mxu0 0.0
        %285 = vmatprep.subr.mxu0 0.0
        %286 = vmatpush1.msra.mxu0 0.0
        %287 = vmatprep.subr.mxu0 0.0
        %288 = vmatpush1.msra.mxu0 0.0
        %289 = vmatprep.subr.mxu0 0.0
        %290 = vmatpush1.msra.mxu0 0.0
        %291 = vmatprep.subr.mxu0 0.0
        %292 = vmatpush1.msra.mxu0 0.0
        %293 = vmatprep.subr.mxu0 %v251
        %294 = vmatpush1.msra.mxu0 %v250
        %295 = vmatprep.subr.mxu0 0.0
        %296 = vmatpush2.msra.mxu0 0.0
        %297 = vmatprep.subr.mxu0 0.0
        %298 = vmatpush2.msra.mxu0 0.0
        %299 = vmatprep.subr.mxu0 0.0
        %300 = vmatpush2.msra.mxu0 0.0
        %301 = vmatprep.subr.mxu0 0.0
        %302 = vmatpush2.msra.mxu0 0.0
        %303 = vmatprep.subr.mxu0 0.0
        %304 = vmatpush2.msra.mxu0 0.0
        %305 = vmatprep.subr.mxu0 0.0
        %306 = vmatpush2.msra.mxu0 0.0
        %307 = vmatprep.subr.mxu0 0.0
        %308 = vmatpush2.msra.mxu0 0.0
        %309 = vmatprep.subr.mxu0 0.0
        %310 = vmatpush2.msra.mxu0 0.0
        %311 = vmatprep.subr.mxu0 0.0
        %312 = vmatpush2.msra.mxu0 0.0
        %313 = vmatprep.subr.mxu0 0.0
        %314 = vmatpush2.msra.mxu0 0.0
        %315 = vmatprep.subr.mxu0 0.0
        %316 = vmatpush2.msra.mxu0 0.0
        %317 = vmatprep.subr.mxu0 0.0
        %318 = vmatpush2.msra.mxu0 0.0
        %319 = vmatprep.subr.mxu0 0.0
        %320 = vmatpush2.msra.mxu0 0.0
        %321 = vmatprep.subr.mxu0 0.0
        %322 = vmatpush2.msra.mxu0 0.0
        %323 = vmatprep.subr.mxu0 0.0
        %324 = vmatpush2.msra.mxu0 0.0
        %325 = vmatprep.subr.mxu0 0.0
        %326 = vmatpush2.msra.mxu0 0.0
        %327 = vmatprep.mubr.f32.mxu0 0.0
        %328 = vmatmul.mubr.f32.gmra.mxu0 %v261
        %v329 = vpop.f32.mrf.mxu0
        %v330 = vadd.f32 %v257, %v329
        %v331 = vpop.f32.mrf.mxu0
        %v332 = vadd.f32 %v257, %v331
        %333 = vdwg.mxu0
        %vm334 = vcmp.gt.f32.partialorder %v330, 0.0
        %vm335 = vcmp.gt.f32.partialorder %v332, 0.0
        %v336 = vmul.f32 %v330, 0.01
        %v337 = vmul.f32 %v332, 0.01
        %v338 = vsel %vm334, %v330, %v336
        %v339 = vsel %vm335, %v332, %v337
        %s340 = scalar_lea.vmem %s3, 32
        %v341 = vld [vmem:[%s340] sm:$0xff]
        %342 = vrot.lane.b32.xlu0 %v338, 17
        %v343 = vpop.permute.xlu0 %342
        %344 = vrot.lane.b32.xlu0 %v339, 17
        %v345 = vpop.permute.xlu0 %344
        %v346 = vlaneseq
        %v347 = vand.u32 %v346, 127
        %vm348 = vcmp.lt.s32.totalorder %v347, 17
        %v349 = vsel %vm348, %v343, %v345
        %v350 = vsel %vm348, %v345, %v343
        %v351 = vld [vmem:[%s5] sm:$0x3]
        %v353 = vlaneseq
        %v354 = vshrl.u32 %v353, 7
        %v355 = vsub.s32 0, %v354
        %v356 = vrot.slane %v351, %v355
        %v357 = vlaneseq
        %v358 = vshrl.u32 %v357, 7
        %v359 = vsub.s32 1, %v358
        %v360 = vrot.slane %v351, %v359
        %v363 = vmul.f32 %v350, %v356
        %v364 = vmul.f32 %v349, %v360
        %v365 = vld [vmem:[%s3] sm:$0xff]
        %vm366 = vcmask 31744
        %v368 = vsel %vm366, %v365, 0
        %vm370 = vcmask 1043456
        %v372 = vsel %vm370, %v363, 0
        %v375 = vsel %vm370, %v364, 0
        %377 = vmatprep.subr.mxu0 0.0
        %378 = vmatpush1.msra.mxu0 0.0
        %379 = vmatprep.subr.mxu0 0.0
        %380 = vmatpush1.msra.mxu0 0.0
        %381 = vmatprep.subr.mxu0 0.0
        %382 = vmatpush1.msra.mxu0 0.0
        %383 = vmatprep.subr.mxu0 0.0
        %384 = vmatpush1.msra.mxu0 0.0
        %385 = vmatprep.subr.mxu0 0.0
        %386 = vmatpush1.msra.mxu0 0.0
        %387 = vmatprep.subr.mxu0 0.0
        %388 = vmatpush1.msra.mxu0 0.0
        %389 = vmatprep.subr.mxu0 0.0
        %390 = vmatpush1.msra.mxu0 0.0
        %391 = vmatprep.subr.mxu0 0.0
        %392 = vmatpush1.msra.mxu0 0.0
        %393 = vmatprep.subr.mxu0 0.0
        %394 = vmatpush1.msra.mxu0 0.0
        %395 = vmatprep.subr.mxu0 0.0
        %396 = vmatpush1.msra.mxu0 0.0
        %397 = vmatprep.subr.mxu0 0.0
        %398 = vmatpush1.msra.mxu0 0.0
        %399 = vmatprep.subr.mxu0 0.0
        %400 = vmatpush1.msra.mxu0 0.0
        %401 = vmatprep.subr.mxu0 0.0
        %402 = vmatpush1.msra.mxu0 0.0
        %403 = vmatprep.subr.mxu0 0.0
        %404 = vmatpush1.msra.mxu0 0.0
        %405 = vmatprep.subr.mxu0 0.0
        %406 = vmatpush1.msra.mxu0 0.0
        %407 = vmatprep.subr.mxu0 %v375
        %408 = vmatpush1.msra.mxu0 %v372
        %409 = vmatprep.subr.mxu0 0.0
        %410 = vmatpush2.msra.mxu0 0.0
        %411 = vmatprep.subr.mxu0 0.0
        %412 = vmatpush2.msra.mxu0 0.0
        %413 = vmatprep.subr.mxu0 0.0
        %414 = vmatpush2.msra.mxu0 0.0
        %415 = vmatprep.subr.mxu0 0.0
        %416 = vmatpush2.msra.mxu0 0.0
        %417 = vmatprep.subr.mxu0 0.0
        %418 = vmatpush2.msra.mxu0 0.0
        %419 = vmatprep.subr.mxu0 0.0
        %420 = vmatpush2.msra.mxu0 0.0
        %421 = vmatprep.subr.mxu0 0.0
        %422 = vmatpush2.msra.mxu0 0.0
        %423 = vmatprep.subr.mxu0 0.0
        %424 = vmatpush2.msra.mxu0 0.0
        %425 = vmatprep.subr.mxu0 0.0
        %426 = vmatpush2.msra.mxu0 0.0
        %427 = vmatprep.subr.mxu0 0.0
        %428 = vmatpush2.msra.mxu0 0.0
        %429 = vmatprep.subr.mxu0 0.0
        %430 = vmatpush2.msra.mxu0 0.0
        %431 = vmatprep.subr.mxu0 0.0
        %432 = vmatpush2.msra.mxu0 0.0
        %433 = vmatprep.subr.mxu0 0.0
        %434 = vmatpush2.msra.mxu0 0.0
        %435 = vmatprep.subr.mxu0 0.0
        %436 = vmatpush2.msra.mxu0 0.0
        %437 = vmatprep.subr.mxu0 0.0
        %438 = vmatpush2.msra.mxu0 0.0
        %439 = vmatprep.subr.mxu0 0.0
        %440 = vmatpush2.msra.mxu0 0.0
        %441 = vmatprep.mubr.f32.mxu0 0.0
        %442 = vmatmul.mubr.f32.gmra.mxu0 %v368
        %v443 = vpop.f32.mrf.mxu0
        %v444 = vadd.f32 0.0, %v443
        %v445 = vpop.f32.mrf.mxu0
        %v446 = vadd.f32 0.0, %v445
        %447 = vdwg.mxu0
        %v449 = vsel %vm366, %v341, 0
        %v452 = vsel %vm370, %v338, 0
        %v455 = vsel %vm370, %v339, 0
        %457 = vmatprep.subr.mxu0 0.0
        %458 = vmatpush1.msra.mxu0 0.0
        %459 = vmatprep.subr.mxu0 0.0
        %460 = vmatpush1.msra.mxu0 0.0
        %461 = vmatprep.subr.mxu0 0.0
        %462 = vmatpush1.msra.mxu0 0.0
        %463 = vmatprep.subr.mxu0 0.0
        %464 = vmatpush1.msra.mxu0 0.0
        %465 = vmatprep.subr.mxu0 0.0
        %466 = vmatpush1.msra.mxu0 0.0
        %467 = vmatprep.subr.mxu0 0.0
        %468 = vmatpush1.msra.mxu0 0.0
        %469 = vmatprep.subr.mxu0 0.0
        %470 = vmatpush1.msra.mxu0 0.0
        %471 = vmatprep.subr.mxu0 0.0
        %472 = vmatpush1.msra.mxu0 0.0
        %473 = vmatprep.subr.mxu0 0.0
        %474 = vmatpush1.msra.mxu0 0.0
        %475 = vmatprep.subr.mxu0 0.0
        %476 = vmatpush1.msra.mxu0 0.0
        %477 = vmatprep.subr.mxu0 0.0
        %478 = vmatpush1.msra.mxu0 0.0
        %479 = vmatprep.subr.mxu0 0.0
        %480 = vmatpush1.msra.mxu0 0.0
        %481 = vmatprep.subr.mxu0 0.0
        %482 = vmatpush1.msra.mxu0 0.0
        %483 = vmatprep.subr.mxu0 0.0
        %484 = vmatpush1.msra.mxu0 0.0
        %485 = vmatprep.subr.mxu0 0.0
        %486 = vmatpush1.msra.mxu0 0.0
        %487 = vmatprep.subr.mxu0 %v455
        %488 = vmatpush1.msra.mxu0 %v452
        %489 = vmatprep.subr.mxu0 0.0
        %490 = vmatpush2.msra.mxu0 0.0
        %491 = vmatprep.subr.mxu0 0.0
        %492 = vmatpush2.msra.mxu0 0.0
        %493 = vmatprep.subr.mxu0 0.0
        %494 = vmatpush2.msra.mxu0 0.0
        %495 = vmatprep.subr.mxu0 0.0
        %496 = vmatpush2.msra.mxu0 0.0
        %497 = vmatprep.subr.mxu0 0.0
        %498 = vmatpush2.msra.mxu0 0.0
        %499 = vmatprep.subr.mxu0 0.0
        %500 = vmatpush2.msra.mxu0 0.0
        %501 = vmatprep.subr.mxu0 0.0
        %502 = vmatpush2.msra.mxu0 0.0
        %503 = vmatprep.subr.mxu0 0.0
        %504 = vmatpush2.msra.mxu0 0.0
        %505 = vmatprep.subr.mxu0 0.0
        %506 = vmatpush2.msra.mxu0 0.0
        %507 = vmatprep.subr.mxu0 0.0
        %508 = vmatpush2.msra.mxu0 0.0
        %509 = vmatprep.subr.mxu0 0.0
        %510 = vmatpush2.msra.mxu0 0.0
        %511 = vmatprep.subr.mxu0 0.0
        %512 = vmatpush2.msra.mxu0 0.0
        %513 = vmatprep.subr.mxu0 0.0
        %514 = vmatpush2.msra.mxu0 0.0
        %515 = vmatprep.subr.mxu0 0.0
        %516 = vmatpush2.msra.mxu0 0.0
        %517 = vmatprep.subr.mxu0 0.0
        %518 = vmatpush2.msra.mxu0 0.0
        %519 = vmatprep.subr.mxu0 0.0
        %520 = vmatpush2.msra.mxu0 0.0
        %521 = vmatprep.mubr.f32.mxu0 0.0
        %522 = vmatmul.mubr.f32.gmra.mxu0 %v449
        %v523 = vpop.f32.mrf.mxu0
        %v524 = vadd.f32 %v444, %v523
        %v525 = vpop.f32.mrf.mxu0
        %v526 = vadd.f32 %v446, %v525
        %527 = vdwg.mxu0
        %528 = vrot.lane.b32.xlu0 %v338, 16
        %v529 = vpop.permute.xlu0 %528
        %530 = vrot.lane.b32.xlu0 %v339, 16
        %v531 = vpop.permute.xlu0 %530
        %vm532 = vcmp.lt.s32.totalorder %v347, 16
        %v533 = vsel %vm532, %v529, %v531
        %v534 = vsel %vm532, %v531, %v529
        %s535 = scalar_lea.vmem %s5, 2
        %v536 = vld [vmem:[%s535] sm:$0x3]
        %v538 = vlaneseq
        %v539 = vshrl.u32 %v538, 7
        %v540 = vsub.s32 0, %v539
        %v541 = vrot.slane %v536, %v540
        %v542 = vlaneseq
        %v543 = vshrl.u32 %v542, 7
        %v544 = vsub.s32 1, %v543
        %v545 = vrot.slane %v536, %v544
        %v548 = vmul.f32 %v534, %v541
        %v549 = vmul.f32 %v533, %v545
        %s550 = scalar_lea.vmem %s3, 8
        %v551 = vld [vmem:[%s550] sm:$0xff]
        %v553 = vsel %vm366, %v551, 0
        %v556 = vsel %vm370, %v548, 0
        %v559 = vsel %vm370, %v549, 0
        %561 = vmatprep.subr.mxu0 0.0
        %562 = vmatpush1.msra.mxu0 0.0
        %563 = vmatprep.subr.mxu0 0.0
        %564 = vmatpush1.msra.mxu0 0.0
        %565 = vmatprep.subr.mxu0 0.0
        %566 = vmatpush1.msra.mxu0 0.0
        %567 = vmatprep.subr.mxu0 0.0
        %568 = vmatpush1.msra.mxu0 0.0
        %569 = vmatprep.subr.mxu0 0.0
        %570 = vmatpush1.msra.mxu0 0.0
        %571 = vmatprep.subr.mxu0 0.0
        %572 = vmatpush1.msra.mxu0 0.0
        %573 = vmatprep.subr.mxu0 0.0
        %574 = vmatpush1.msra.mxu0 0.0
        %575 = vmatprep.subr.mxu0 0.0
        %576 = vmatpush1.msra.mxu0 0.0
        %577 = vmatprep.subr.mxu0 0.0
        %578 = vmatpush1.msra.mxu0 0.0
        %579 = vmatprep.subr.mxu0 0.0
        %580 = vmatpush1.msra.mxu0 0.0
        %581 = vmatprep.subr.mxu0 0.0
        %582 = vmatpush1.msra.mxu0 0.0
        %583 = vmatprep.subr.mxu0 0.0
        %584 = vmatpush1.msra.mxu0 0.0
        %585 = vmatprep.subr.mxu0 0.0
        %586 = vmatpush1.msra.mxu0 0.0
        %587 = vmatprep.subr.mxu0 0.0
        %588 = vmatpush1.msra.mxu0 0.0
        %589 = vmatprep.subr.mxu0 0.0
        %590 = vmatpush1.msra.mxu0 0.0
        %591 = vmatprep.subr.mxu0 %v559
        %592 = vmatpush1.msra.mxu0 %v556
        %593 = vmatprep.subr.mxu0 0.0
        %594 = vmatpush2.msra.mxu0 0.0
        %595 = vmatprep.subr.mxu0 0.0
        %596 = vmatpush2.msra.mxu0 0.0
        %597 = vmatprep.subr.mxu0 0.0
        %598 = vmatpush2.msra.mxu0 0.0
        %599 = vmatprep.subr.mxu0 0.0
        %600 = vmatpush2.msra.mxu0 0.0
        %601 = vmatprep.subr.mxu0 0.0
        %602 = vmatpush2.msra.mxu0 0.0
        %603 = vmatprep.subr.mxu0 0.0
        %604 = vmatpush2.msra.mxu0 0.0
        %605 = vmatprep.subr.mxu0 0.0
        %606 = vmatpush2.msra.mxu0 0.0
        %607 = vmatprep.subr.mxu0 0.0
        %608 = vmatpush2.msra.mxu0 0.0
        %609 = vmatprep.subr.mxu0 0.0
        %610 = vmatpush2.msra.mxu0 0.0
        %611 = vmatprep.subr.mxu0 0.0
        %612 = vmatpush2.msra.mxu0 0.0
        %613 = vmatprep.subr.mxu0 0.0
        %614 = vmatpush2.msra.mxu0 0.0
        %615 = vmatprep.subr.mxu0 0.0
        %616 = vmatpush2.msra.mxu0 0.0
        %617 = vmatprep.subr.mxu0 0.0
        %618 = vmatpush2.msra.mxu0 0.0
        %619 = vmatprep.subr.mxu0 0.0
        %620 = vmatpush2.msra.mxu0 0.0
        %621 = vmatprep.subr.mxu0 0.0
        %622 = vmatpush2.msra.mxu0 0.0
        %623 = vmatprep.subr.mxu0 0.0
        %624 = vmatpush2.msra.mxu0 0.0
        %625 = vmatprep.mubr.f32.mxu0 0.0
        %626 = vmatmul.mubr.f32.gmra.mxu0 %v553
        %v627 = vpop.f32.mrf.mxu0
        %v628 = vadd.f32 0.0, %v627
        %v629 = vpop.f32.mrf.mxu0
        %v630 = vadd.f32 0.0, %v629
        %631 = vdwg.mxu0
        %v632 = vadd.f32 %v524, %v628
        %v633 = vadd.f32 %v526, %v630
        %634 = vrot.lane.b32.xlu0 %v338, 15
        %v635 = vpop.permute.xlu0 %634
        %636 = vrot.lane.b32.xlu0 %v339, 15
        %v637 = vpop.permute.xlu0 %636
        %vm638 = vcmp.lt.s32.totalorder %v347, 15
        %v639 = vsel %vm638, %v635, %v637
        %v640 = vsel %vm638, %v637, %v635
        %s641 = scalar_lea.vmem %s5, 4
        %v642 = vld [vmem:[%s641] sm:$0x3]
        %v644 = vlaneseq
        %v645 = vshrl.u32 %v644, 7
        %v646 = vsub.s32 0, %v645
        %v647 = vrot.slane %v642, %v646
        %v648 = vlaneseq
        %v649 = vshrl.u32 %v648, 7
        %v650 = vsub.s32 1, %v649
        %v651 = vrot.slane %v642, %v650
        %v654 = vmul.f32 %v640, %v647
        %v655 = vmul.f32 %v639, %v651
        %s656 = scalar_lea.vmem %s3, 16
        %v657 = vld [vmem:[%s656] sm:$0xff]
        %v659 = vsel %vm366, %v657, 0
        %v662 = vsel %vm370, %v654, 0
        %v665 = vsel %vm370, %v655, 0
        %667 = vmatprep.subr.mxu0 0.0
        %668 = vmatpush1.msra.mxu0 0.0
        %669 = vmatprep.subr.mxu0 0.0
        %670 = vmatpush1.msra.mxu0 0.0
        %671 = vmatprep.subr.mxu0 0.0
        %672 = vmatpush1.msra.mxu0 0.0
        %673 = vmatprep.subr.mxu0 0.0
        %674 = vmatpush1.msra.mxu0 0.0
        %675 = vmatprep.subr.mxu0 0.0
        %676 = vmatpush1.msra.mxu0 0.0
        %677 = vmatprep.subr.mxu0 0.0
        %678 = vmatpush1.msra.mxu0 0.0
        %679 = vmatprep.subr.mxu0 0.0
        %680 = vmatpush1.msra.mxu0 0.0
        %681 = vmatprep.subr.mxu0 0.0
        %682 = vmatpush1.msra.mxu0 0.0
        %683 = vmatprep.subr.mxu0 0.0
        %684 = vmatpush1.msra.mxu0 0.0
        %685 = vmatprep.subr.mxu0 0.0
        %686 = vmatpush1.msra.mxu0 0.0
        %687 = vmatprep.subr.mxu0 0.0
        %688 = vmatpush1.msra.mxu0 0.0
        %689 = vmatprep.subr.mxu0 0.0
        %690 = vmatpush1.msra.mxu0 0.0
        %691 = vmatprep.subr.mxu0 0.0
        %692 = vmatpush1.msra.mxu0 0.0
        %693 = vmatprep.subr.mxu0 0.0
        %694 = vmatpush1.msra.mxu0 0.0
        %695 = vmatprep.subr.mxu0 0.0
        %696 = vmatpush1.msra.mxu0 0.0
        %697 = vmatprep.subr.mxu0 %v665
        %698 = vmatpush1.msra.mxu0 %v662
        %699 = vmatprep.subr.mxu0 0.0
        %700 = vmatpush2.msra.mxu0 0.0
        %701 = vmatprep.subr.mxu0 0.0
        %702 = vmatpush2.msra.mxu0 0.0
        %703 = vmatprep.subr.mxu0 0.0
        %704 = vmatpush2.msra.mxu0 0.0
        %705 = vmatprep.subr.mxu0 0.0
        %706 = vmatpush2.msra.mxu0 0.0
        %707 = vmatprep.subr.mxu0 0.0
        %708 = vmatpush2.msra.mxu0 0.0
        %709 = vmatprep.subr.mxu0 0.0
        %710 = vmatpush2.msra.mxu0 0.0
        %711 = vmatprep.subr.mxu0 0.0
        %712 = vmatpush2.msra.mxu0 0.0
        %713 = vmatprep.subr.mxu0 0.0
        %714 = vmatpush2.msra.mxu0 0.0
        %715 = vmatprep.subr.mxu0 0.0
        %716 = vmatpush2.msra.mxu0 0.0
        %717 = vmatprep.subr.mxu0 0.0
        %718 = vmatpush2.msra.mxu0 0.0
        %719 = vmatprep.subr.mxu0 0.0
        %720 = vmatpush2.msra.mxu0 0.0
        %721 = vmatprep.subr.mxu0 0.0
        %722 = vmatpush2.msra.mxu0 0.0
        %723 = vmatprep.subr.mxu0 0.0
        %724 = vmatpush2.msra.mxu0 0.0
        %725 = vmatprep.subr.mxu0 0.0
        %726 = vmatpush2.msra.mxu0 0.0
        %727 = vmatprep.subr.mxu0 0.0
        %728 = vmatpush2.msra.mxu0 0.0
        %729 = vmatprep.subr.mxu0 0.0
        %730 = vmatpush2.msra.mxu0 0.0
        %731 = vmatprep.mubr.f32.mxu0 0.0
        %732 = vmatmul.mubr.f32.gmra.mxu0 %v659
        %v733 = vpop.f32.mrf.mxu0
        %v734 = vadd.f32 0.0, %v733
        %v735 = vpop.f32.mrf.mxu0
        %v736 = vadd.f32 0.0, %v735
        %737 = vdwg.mxu0
        %v738 = vadd.f32 %v632, %v734
        %v739 = vadd.f32 %v633, %v736
        %740 = vrot.lane.b32.xlu0 %v338, 1
        %v741 = vpop.permute.xlu0 %740
        %742 = vrot.lane.b32.xlu0 %v339, 1
        %v743 = vpop.permute.xlu0 %742
        %vm744 = vcmp.lt.s32.totalorder %v347, 1
        %v745 = vsel %vm744, %v741, %v743
        %v746 = vsel %vm744, %v743, %v741
        %s747 = scalar_lea.vmem %s5, 6
        %v748 = vld [vmem:[%s747] sm:$0x3]
        %v750 = vlaneseq
        %v751 = vshrl.u32 %v750, 7
        %v752 = vsub.s32 0, %v751
        %v753 = vrot.slane %v748, %v752
        %v754 = vlaneseq
        %v755 = vshrl.u32 %v754, 7
        %v756 = vsub.s32 1, %v755
        %v757 = vrot.slane %v748, %v756
        %v760 = vmul.f32 %v746, %v753
        %v761 = vmul.f32 %v745, %v757
        %s762 = scalar_lea.vmem %s3, 24
        %v763 = vld [vmem:[%s762] sm:$0xff]
        %v765 = vsel %vm366, %v763, 0
        %v768 = vsel %vm370, %v760, 0
        %v771 = vsel %vm370, %v761, 0
        %773 = vmatprep.subr.mxu0 0.0
        %774 = vmatpush1.msra.mxu0 0.0
        %775 = vmatprep.subr.mxu0 0.0
        %776 = vmatpush1.msra.mxu0 0.0
        %777 = vmatprep.subr.mxu0 0.0
        %778 = vmatpush1.msra.mxu0 0.0
        %779 = vmatprep.subr.mxu0 0.0
        %780 = vmatpush1.msra.mxu0 0.0
        %781 = vmatprep.subr.mxu0 0.0
        %782 = vmatpush1.msra.mxu0 0.0
        %783 = vmatprep.subr.mxu0 0.0
        %784 = vmatpush1.msra.mxu0 0.0
        %785 = vmatprep.subr.mxu0 0.0
        %786 = vmatpush1.msra.mxu0 0.0
        %787 = vmatprep.subr.mxu0 0.0
        %788 = vmatpush1.msra.mxu0 0.0
        %789 = vmatprep.subr.mxu0 0.0
        %790 = vmatpush1.msra.mxu0 0.0
        %791 = vmatprep.subr.mxu0 0.0
        %792 = vmatpush1.msra.mxu0 0.0
        %793 = vmatprep.subr.mxu0 0.0
        %794 = vmatpush1.msra.mxu0 0.0
        %795 = vmatprep.subr.mxu0 0.0
        %796 = vmatpush1.msra.mxu0 0.0
        %797 = vmatprep.subr.mxu0 0.0
        %798 = vmatpush1.msra.mxu0 0.0
        %799 = vmatprep.subr.mxu0 0.0
        %800 = vmatpush1.msra.mxu0 0.0
        %801 = vmatprep.subr.mxu0 0.0
        %802 = vmatpush1.msra.mxu0 0.0
        %803 = vmatprep.subr.mxu0 %v771
        %804 = vmatpush1.msra.mxu0 %v768
        %805 = vmatprep.subr.mxu0 0.0
        %806 = vmatpush2.msra.mxu0 0.0
        %807 = vmatprep.subr.mxu0 0.0
        %808 = vmatpush2.msra.mxu0 0.0
        %809 = vmatprep.subr.mxu0 0.0
        %810 = vmatpush2.msra.mxu0 0.0
        %811 = vmatprep.subr.mxu0 0.0
        %812 = vmatpush2.msra.mxu0 0.0
        %813 = vmatprep.subr.mxu0 0.0
        %814 = vmatpush2.msra.mxu0 0.0
        %815 = vmatprep.subr.mxu0 0.0
        %816 = vmatpush2.msra.mxu0 0.0
        %817 = vmatprep.subr.mxu0 0.0
        %818 = vmatpush2.msra.mxu0 0.0
        %819 = vmatprep.subr.mxu0 0.0
        %820 = vmatpush2.msra.mxu0 0.0
        %821 = vmatprep.subr.mxu0 0.0
        %822 = vmatpush2.msra.mxu0 0.0
        %823 = vmatprep.subr.mxu0 0.0
        %824 = vmatpush2.msra.mxu0 0.0
        %825 = vmatprep.subr.mxu0 0.0
        %826 = vmatpush2.msra.mxu0 0.0
        %827 = vmatprep.subr.mxu0 0.0
        %828 = vmatpush2.msra.mxu0 0.0
        %829 = vmatprep.subr.mxu0 0.0
        %830 = vmatpush2.msra.mxu0 0.0
        %831 = vmatprep.subr.mxu0 0.0
        %832 = vmatpush2.msra.mxu0 0.0
        %833 = vmatprep.subr.mxu0 0.0
        %834 = vmatpush2.msra.mxu0 0.0
        %835 = vmatprep.subr.mxu0 0.0
        %836 = vmatpush2.msra.mxu0 0.0
        %837 = vmatprep.mubr.f32.mxu0 0.0
        %838 = vmatmul.mubr.f32.gmra.mxu0 %v765
        %v839 = vpop.f32.mrf.mxu0
        %v840 = vadd.f32 0.0, %v839
        %v841 = vpop.f32.mrf.mxu0
        %v842 = vadd.f32 0.0, %v841
        %843 = vdwg.mxu0
        %v844 = vadd.f32 %v738, %v840
        %v845 = vadd.f32 %v739, %v842
        %846 = vrot.lane.b32.xlu0 %v338, 127
        %v847 = vpop.permute.xlu0 %846
        %848 = vrot.lane.b32.xlu0 %v339, 127
        %v849 = vpop.permute.xlu0 %848
        %vm850 = vcmp.lt.s32.totalorder %v347, 127
        %v851 = vsel %vm850, %v847, %v849
        %v852 = vsel %vm850, %v849, %v847
        %s853 = scalar_lea.vmem %s5, 10
        %v854 = vld [vmem:[%s853] sm:$0x3]
        %v856 = vlaneseq
        %v857 = vshrl.u32 %v856, 7
        %v858 = vsub.s32 0, %v857
        %v859 = vrot.slane %v854, %v858
        %v860 = vlaneseq
        %v861 = vshrl.u32 %v860, 7
        %v862 = vsub.s32 1, %v861
        %v863 = vrot.slane %v854, %v862
        %v866 = vmul.f32 %v851, %v859
        %v867 = vmul.f32 %v852, %v863
        %s868 = scalar_lea.vmem %s3, 40
        %v869 = vld [vmem:[%s868] sm:$0xff]
        %v871 = vsel %vm366, %v869, 0
        %v874 = vsel %vm370, %v866, 0
        %v877 = vsel %vm370, %v867, 0
        %879 = vmatprep.subr.mxu0 0.0
        %880 = vmatpush1.msra.mxu0 0.0
        %881 = vmatprep.subr.mxu0 0.0
        %882 = vmatpush1.msra.mxu0 0.0
        %883 = vmatprep.subr.mxu0 0.0
        %884 = vmatpush1.msra.mxu0 0.0
        %885 = vmatprep.subr.mxu0 0.0
        %886 = vmatpush1.msra.mxu0 0.0
        %887 = vmatprep.subr.mxu0 0.0
        %888 = vmatpush1.msra.mxu0 0.0
        %889 = vmatprep.subr.mxu0 0.0
        %890 = vmatpush1.msra.mxu0 0.0
        %891 = vmatprep.subr.mxu0 0.0
        %892 = vmatpush1.msra.mxu0 0.0
        %893 = vmatprep.subr.mxu0 0.0
        %894 = vmatpush1.msra.mxu0 0.0
        %895 = vmatprep.subr.mxu0 0.0
        %896 = vmatpush1.msra.mxu0 0.0
        %897 = vmatprep.subr.mxu0 0.0
        %898 = vmatpush1.msra.mxu0 0.0
        %899 = vmatprep.subr.mxu0 0.0
        %900 = vmatpush1.msra.mxu0 0.0
        %901 = vmatprep.subr.mxu0 0.0
        %902 = vmatpush1.msra.mxu0 0.0
        %903 = vmatprep.subr.mxu0 0.0
        %904 = vmatpush1.msra.mxu0 0.0
        %905 = vmatprep.subr.mxu0 0.0
        %906 = vmatpush1.msra.mxu0 0.0
        %907 = vmatprep.subr.mxu0 0.0
        %908 = vmatpush1.msra.mxu0 0.0
        %909 = vmatprep.subr.mxu0 %v877
        %910 = vmatpush1.msra.mxu0 %v874
        %911 = vmatprep.subr.mxu0 0.0
        %912 = vmatpush2.msra.mxu0 0.0
        %913 = vmatprep.subr.mxu0 0.0
        %914 = vmatpush2.msra.mxu0 0.0
        %915 = vmatprep.subr.mxu0 0.0
        %916 = vmatpush2.msra.mxu0 0.0
        %917 = vmatprep.subr.mxu0 0.0
        %918 = vmatpush2.msra.mxu0 0.0
        %919 = vmatprep.subr.mxu0 0.0
        %920 = vmatpush2.msra.mxu0 0.0
        %921 = vmatprep.subr.mxu0 0.0
        %922 = vmatpush2.msra.mxu0 0.0
        %923 = vmatprep.subr.mxu0 0.0
        %924 = vmatpush2.msra.mxu0 0.0
        %925 = vmatprep.subr.mxu0 0.0
        %926 = vmatpush2.msra.mxu0 0.0
        %927 = vmatprep.subr.mxu0 0.0
        %928 = vmatpush2.msra.mxu0 0.0
        %929 = vmatprep.subr.mxu0 0.0
        %930 = vmatpush2.msra.mxu0 0.0
        %931 = vmatprep.subr.mxu0 0.0
        %932 = vmatpush2.msra.mxu0 0.0
        %933 = vmatprep.subr.mxu0 0.0
        %934 = vmatpush2.msra.mxu0 0.0
        %935 = vmatprep.subr.mxu0 0.0
        %936 = vmatpush2.msra.mxu0 0.0
        %937 = vmatprep.subr.mxu0 0.0
        %938 = vmatpush2.msra.mxu0 0.0
        %939 = vmatprep.subr.mxu0 0.0
        %940 = vmatpush2.msra.mxu0 0.0
        %941 = vmatprep.subr.mxu0 0.0
        %942 = vmatpush2.msra.mxu0 0.0
        %943 = vmatprep.mubr.f32.mxu0 0.0
        %944 = vmatmul.mubr.f32.gmra.mxu0 %v871
        %v945 = vpop.f32.mrf.mxu0
        %v946 = vadd.f32 0.0, %v945
        %v947 = vpop.f32.mrf.mxu0
        %v948 = vadd.f32 0.0, %v947
        %949 = vdwg.mxu0
        %v950 = vadd.f32 %v844, %v946
        %v951 = vadd.f32 %v845, %v948
        %952 = vrot.lane.b32.xlu0 %v338, 113
        %v953 = vpop.permute.xlu0 %952
        %954 = vrot.lane.b32.xlu0 %v339, 113
        %v955 = vpop.permute.xlu0 %954
        %vm956 = vcmp.lt.s32.totalorder %v347, 113
        %v957 = vsel %vm956, %v953, %v955
        %v958 = vsel %vm956, %v955, %v953
        %s959 = scalar_lea.vmem %s5, 12
        %v960 = vld [vmem:[%s959] sm:$0x3]
        %v962 = vlaneseq
        %v963 = vshrl.u32 %v962, 7
        %v964 = vsub.s32 0, %v963
        %v965 = vrot.slane %v960, %v964
        %v966 = vlaneseq
        %v967 = vshrl.u32 %v966, 7
        %v968 = vsub.s32 1, %v967
        %v969 = vrot.slane %v960, %v968
        %v972 = vmul.f32 %v957, %v965
        %v973 = vmul.f32 %v958, %v969
        %s974 = scalar_lea.vmem %s3, 48
        %v975 = vld [vmem:[%s974] sm:$0xff]
        %v977 = vsel %vm366, %v975, 0
        %v980 = vsel %vm370, %v972, 0
        %v983 = vsel %vm370, %v973, 0
        %985 = vmatprep.subr.mxu0 0.0
        %986 = vmatpush1.msra.mxu0 0.0
        %987 = vmatprep.subr.mxu0 0.0
        %988 = vmatpush1.msra.mxu0 0.0
        %989 = vmatprep.subr.mxu0 0.0
        %990 = vmatpush1.msra.mxu0 0.0
        %991 = vmatprep.subr.mxu0 0.0
        %992 = vmatpush1.msra.mxu0 0.0
        %993 = vmatprep.subr.mxu0 0.0
        %994 = vmatpush1.msra.mxu0 0.0
        %995 = vmatprep.subr.mxu0 0.0
        %996 = vmatpush1.msra.mxu0 0.0
        %997 = vmatprep.subr.mxu0 0.0
        %998 = vmatpush1.msra.mxu0 0.0
        %999 = vmatprep.subr.mxu0 0.0
        %1000 = vmatpush1.msra.mxu0 0.0
        %1001 = vmatprep.subr.mxu0 0.0
        %1002 = vmatpush1.msra.mxu0 0.0
        %1003 = vmatprep.subr.mxu0 0.0
        %1004 = vmatpush1.msra.mxu0 0.0
        %1005 = vmatprep.subr.mxu0 0.0
        %1006 = vmatpush1.msra.mxu0 0.0
        %1007 = vmatprep.subr.mxu0 0.0
        %1008 = vmatpush1.msra.mxu0 0.0
        %1009 = vmatprep.subr.mxu0 0.0
        %1010 = vmatpush1.msra.mxu0 0.0
        %1011 = vmatprep.subr.mxu0 0.0
        %1012 = vmatpush1.msra.mxu0 0.0
        %1013 = vmatprep.subr.mxu0 0.0
        %1014 = vmatpush1.msra.mxu0 0.0
        %1015 = vmatprep.subr.mxu0 %v983
        %1016 = vmatpush1.msra.mxu0 %v980
        %1017 = vmatprep.subr.mxu0 0.0
        %1018 = vmatpush2.msra.mxu0 0.0
        %1019 = vmatprep.subr.mxu0 0.0
        %1020 = vmatpush2.msra.mxu0 0.0
        %1021 = vmatprep.subr.mxu0 0.0
        %1022 = vmatpush2.msra.mxu0 0.0
        %1023 = vmatprep.subr.mxu0 0.0
        %1024 = vmatpush2.msra.mxu0 0.0
        %1025 = vmatprep.subr.mxu0 0.0
        %1026 = vmatpush2.msra.mxu0 0.0
        %1027 = vmatprep.subr.mxu0 0.0
        %1028 = vmatpush2.msra.mxu0 0.0
        %1029 = vmatprep.subr.mxu0 0.0
        %1030 = vmatpush2.msra.mxu0 0.0
        %1031 = vmatprep.subr.mxu0 0.0
        %1032 = vmatpush2.msra.mxu0 0.0
        %1033 = vmatprep.subr.mxu0 0.0
        %1034 = vmatpush2.msra.mxu0 0.0
        %1035 = vmatprep.subr.mxu0 0.0
        %1036 = vmatpush2.msra.mxu0 0.0
        %1037 = vmatprep.subr.mxu0 0.0
        %1038 = vmatpush2.msra.mxu0 0.0
        %1039 = vmatprep.subr.mxu0 0.0
        %1040 = vmatpush2.msra.mxu0 0.0
        %1041 = vmatprep.subr.mxu0 0.0
        %1042 = vmatpush2.msra.mxu0 0.0
        %1043 = vmatprep.subr.mxu0 0.0
        %1044 = vmatpush2.msra.mxu0 0.0
        %1045 = vmatprep.subr.mxu0 0.0
        %1046 = vmatpush2.msra.mxu0 0.0
        %1047 = vmatprep.subr.mxu0 0.0
        %1048 = vmatpush2.msra.mxu0 0.0
        %1049 = vmatprep.mubr.f32.mxu0 0.0
        %1050 = vmatmul.mubr.f32.gmra.mxu0 %v977
        %v1051 = vpop.f32.mrf.mxu0
        %v1052 = vadd.f32 0.0, %v1051
        %v1053 = vpop.f32.mrf.mxu0
        %v1054 = vadd.f32 0.0, %v1053
        %1055 = vdwg.mxu0
        %v1056 = vadd.f32 %v950, %v1052
        %v1057 = vadd.f32 %v951, %v1054
        %1058 = vrot.lane.b32.xlu0 %v338, 112
        %v1059 = vpop.permute.xlu0 %1058
        %1060 = vrot.lane.b32.xlu0 %v339, 112
        %v1061 = vpop.permute.xlu0 %1060
        %vm1062 = vcmp.lt.s32.totalorder %v347, 112
        %v1063 = vsel %vm1062, %v1059, %v1061
        %v1064 = vsel %vm1062, %v1061, %v1059
        %s1065 = scalar_lea.vmem %s5, 14
        %v1066 = vld [vmem:[%s1065] sm:$0x3]
        %v1068 = vlaneseq
        %v1069 = vshrl.u32 %v1068, 7
        %v1070 = vsub.s32 0, %v1069
        %v1071 = vrot.slane %v1066, %v1070
        %v1072 = vlaneseq
        %v1073 = vshrl.u32 %v1072, 7
        %v1074 = vsub.s32 1, %v1073
        %v1075 = vrot.slane %v1066, %v1074
        %v1078 = vmul.f32 %v1063, %v1071
        %v1079 = vmul.f32 %v1064, %v1075
        %s1080 = scalar_lea.vmem %s3, 56
        %v1081 = vld [vmem:[%s1080] sm:$0xff]
        %v1083 = vsel %vm366, %v1081, 0
        %v1086 = vsel %vm370, %v1078, 0
        %v1089 = vsel %vm370, %v1079, 0
        %1091 = vmatprep.subr.mxu0 0.0
        %1092 = vmatpush1.msra.mxu0 0.0
        %1093 = vmatprep.subr.mxu0 0.0
        %1094 = vmatpush1.msra.mxu0 0.0
        %1095 = vmatprep.subr.mxu0 0.0
        %1096 = vmatpush1.msra.mxu0 0.0
        %1097 = vmatprep.subr.mxu0 0.0
        %1098 = vmatpush1.msra.mxu0 0.0
        %1099 = vmatprep.subr.mxu0 0.0
        %1100 = vmatpush1.msra.mxu0 0.0
        %1101 = vmatprep.subr.mxu0 0.0
        %1102 = vmatpush1.msra.mxu0 0.0
        %1103 = vmatprep.subr.mxu0 0.0
        %1104 = vmatpush1.msra.mxu0 0.0
        %1105 = vmatprep.subr.mxu0 0.0
        %1106 = vmatpush1.msra.mxu0 0.0
        %1107 = vmatprep.subr.mxu0 0.0
        %1108 = vmatpush1.msra.mxu0 0.0
        %1109 = vmatprep.subr.mxu0 0.0
        %1110 = vmatpush1.msra.mxu0 0.0
        %1111 = vmatprep.subr.mxu0 0.0
        %1112 = vmatpush1.msra.mxu0 0.0
        %1113 = vmatprep.subr.mxu0 0.0
        %1114 = vmatpush1.msra.mxu0 0.0
        %1115 = vmatprep.subr.mxu0 0.0
        %1116 = vmatpush1.msra.mxu0 0.0
        %1117 = vmatprep.subr.mxu0 0.0
        %1118 = vmatpush1.msra.mxu0 0.0
        %1119 = vmatprep.subr.mxu0 0.0
        %1120 = vmatpush1.msra.mxu0 0.0
        %1121 = vmatprep.subr.mxu0 %v1089
        %1122 = vmatpush1.msra.mxu0 %v1086
        %1123 = vmatprep.subr.mxu0 0.0
        %1124 = vmatpush2.msra.mxu0 0.0
        %1125 = vmatprep.subr.mxu0 0.0
        %1126 = vmatpush2.msra.mxu0 0.0
        %1127 = vmatprep.subr.mxu0 0.0
        %1128 = vmatpush2.msra.mxu0 0.0
        %1129 = vmatprep.subr.mxu0 0.0
        %1130 = vmatpush2.msra.mxu0 0.0
        %1131 = vmatprep.subr.mxu0 0.0
        %1132 = vmatpush2.msra.mxu0 0.0
        %1133 = vmatprep.subr.mxu0 0.0
        %1134 = vmatpush2.msra.mxu0 0.0
        %1135 = vmatprep.subr.mxu0 0.0
        %1136 = vmatpush2.msra.mxu0 0.0
        %1137 = vmatprep.subr.mxu0 0.0
        %1138 = vmatpush2.msra.mxu0 0.0
        %1139 = vmatprep.subr.mxu0 0.0
        %1140 = vmatpush2.msra.mxu0 0.0
        %1141 = vmatprep.subr.mxu0 0.0
        %1142 = vmatpush2.msra.mxu0 0.0
        %1143 = vmatprep.subr.mxu0 0.0
        %1144 = vmatpush2.msra.mxu0 0.0
        %1145 = vmatprep.subr.mxu0 0.0
        %1146 = vmatpush2.msra.mxu0 0.0
        %1147 = vmatprep.subr.mxu0 0.0
        %1148 = vmatpush2.msra.mxu0 0.0
        %1149 = vmatprep.subr.mxu0 0.0
        %1150 = vmatpush2.msra.mxu0 0.0
        %1151 = vmatprep.subr.mxu0 0.0
        %1152 = vmatpush2.msra.mxu0 0.0
        %1153 = vmatprep.subr.mxu0 0.0
        %1154 = vmatpush2.msra.mxu0 0.0
        %1155 = vmatprep.mubr.f32.mxu0 0.0
        %1156 = vmatmul.mubr.f32.gmra.mxu0 %v1083
        %v1157 = vpop.f32.mrf.mxu0
        %v1158 = vadd.f32 0.0, %v1157
        %v1159 = vpop.f32.mrf.mxu0
        %v1160 = vadd.f32 0.0, %v1159
        %1161 = vdwg.mxu0
        %v1162 = vadd.f32 %v1056, %v1158
        %v1163 = vadd.f32 %v1057, %v1160
        %1164 = vrot.lane.b32.xlu0 %v338, 111
        %v1165 = vpop.permute.xlu0 %1164
        %1166 = vrot.lane.b32.xlu0 %v339, 111
        %v1167 = vpop.permute.xlu0 %1166
        %vm1168 = vcmp.lt.s32.totalorder %v347, 111
        %v1169 = vsel %vm1168, %v1165, %v1167
        %v1170 = vsel %vm1168, %v1167, %v1165
        %s1171 = scalar_lea.vmem %s5, 16
        %v1172 = vld [vmem:[%s1171] sm:$0x3]
        %v1174 = vlaneseq
        %v1175 = vshrl.u32 %v1174, 7
        %v1176 = vsub.s32 0, %v1175
        %v1177 = vrot.slane %v1172, %v1176
        %v1178 = vlaneseq
        %v1179 = vshrl.u32 %v1178, 7
        %v1180 = vsub.s32 1, %v1179
        %v1181 = vrot.slane %v1172, %v1180
        %v1184 = vmul.f32 %v1169, %v1177
        %v1185 = vmul.f32 %v1170, %v1181
        %s1186 = scalar_lea.vmem %s3, 64
        %v1187 = vld [vmem:[%s1186] sm:$0xff]
        %v1189 = vsel %vm366, %v1187, 0
        %v1192 = vsel %vm370, %v1184, 0
        %v1195 = vsel %vm370, %v1185, 0
        %1197 = vmatprep.subr.mxu0 0.0
        %1198 = vmatpush1.msra.mxu0 0.0
        %1199 = vmatprep.subr.mxu0 0.0
        %1200 = vmatpush1.msra.mxu0 0.0
        %1201 = vmatprep.subr.mxu0 0.0
        %1202 = vmatpush1.msra.mxu0 0.0
        %1203 = vmatprep.subr.mxu0 0.0
        %1204 = vmatpush1.msra.mxu0 0.0
        %1205 = vmatprep.subr.mxu0 0.0
        %1206 = vmatpush1.msra.mxu0 0.0
        %1207 = vmatprep.subr.mxu0 0.0
        %1208 = vmatpush1.msra.mxu0 0.0
        %1209 = vmatprep.subr.mxu0 0.0
        %1210 = vmatpush1.msra.mxu0 0.0
        %1211 = vmatprep.subr.mxu0 0.0
        %1212 = vmatpush1.msra.mxu0 0.0
        %1213 = vmatprep.subr.mxu0 0.0
        %1214 = vmatpush1.msra.mxu0 0.0
        %1215 = vmatprep.subr.mxu0 0.0
        %1216 = vmatpush1.msra.mxu0 0.0
        %1217 = vmatprep.subr.mxu0 0.0
        %1218 = vmatpush1.msra.mxu0 0.0
        %1219 = vmatprep.subr.mxu0 0.0
        %1220 = vmatpush1.msra.mxu0 0.0
        %1221 = vmatprep.subr.mxu0 0.0
        %1222 = vmatpush1.msra.mxu0 0.0
        %1223 = vmatprep.subr.mxu0 0.0
        %1224 = vmatpush1.msra.mxu0 0.0
        %1225 = vmatprep.subr.mxu0 0.0
        %1226 = vmatpush1.msra.mxu0 0.0
        %1227 = vmatprep.subr.mxu0 %v1195
        %1228 = vmatpush1.msra.mxu0 %v1192
        %1229 = vmatprep.subr.mxu0 0.0
        %1230 = vmatpush2.msra.mxu0 0.0
        %1231 = vmatprep.subr.mxu0 0.0
        %1232 = vmatpush2.msra.mxu0 0.0
        %1233 = vmatprep.subr.mxu0 0.0
        %1234 = vmatpush2.msra.mxu0 0.0
        %1235 = vmatprep.subr.mxu0 0.0
        %1236 = vmatpush2.msra.mxu0 0.0
        %1237 = vmatprep.subr.mxu0 0.0
        %1238 = vmatpush2.msra.mxu0 0.0
        %1239 = vmatprep.subr.mxu0 0.0
        %1240 = vmatpush2.msra.mxu0 0.0
        %1241 = vmatprep.subr.mxu0 0.0
        %1242 = vmatpush2.msra.mxu0 0.0
        %1243 = vmatprep.subr.mxu0 0.0
        %1244 = vmatpush2.msra.mxu0 0.0
        %1245 = vmatprep.subr.mxu0 0.0
        %1246 = vmatpush2.msra.mxu0 0.0
        %1247 = vmatprep.subr.mxu0 0.0
        %1248 = vmatpush2.msra.mxu0 0.0
        %1249 = vmatprep.subr.mxu0 0.0
        %1250 = vmatpush2.msra.mxu0 0.0
        %1251 = vmatprep.subr.mxu0 0.0
        %1252 = vmatpush2.msra.mxu0 0.0
        %1253 = vmatprep.subr.mxu0 0.0
        %1254 = vmatpush2.msra.mxu0 0.0
        %1255 = vmatprep.subr.mxu0 0.0
        %1256 = vmatpush2.msra.mxu0 0.0
        %1257 = vmatprep.subr.mxu0 0.0
        %1258 = vmatpush2.msra.mxu0 0.0
        %1259 = vmatprep.subr.mxu0 0.0
        %1260 = vmatpush2.msra.mxu0 0.0
        %1261 = vmatprep.mubr.f32.mxu0 0.0
        %1262 = vmatmul.mubr.f32.gmra.mxu0 %v1189
        %v1263 = vpop.f32.mrf.mxu0
        %v1264 = vadd.f32 0.0, %v1263
        %v1265 = vpop.f32.mrf.mxu0
        %v1266 = vadd.f32 0.0, %v1265
        %1267 = vdwg.mxu0
        %v1268 = vadd.f32 %v1162, %v1264
        %v1269 = vadd.f32 %v1163, %v1266
        %v1270 = vld [vmem:[%s4] sm:$0xff]
        %1272 = vset.pattern.permute.xlu0 0
        %1273 = vperm.xlu0 %1272, %v1270
        %v1274 = vpop.permute.xlu0 %1273
        %v1276 = vadd.f32 %v1268, %v1274
        %v1277 = vadd.f32 %v1269, %v1274
        %vm1278 = vcmp.gt.f32.partialorder %v1276, 0.0
        %vm1279 = vcmp.gt.f32.partialorder %v1277, 0.0
        %v1280 = vmul.f32 %v1276, 0.01
        %v1281 = vmul.f32 %v1277, 0.01
        %v1282 = vsel %vm1278, %v1276, %v1280
        %v1283 = vsel %vm1279, %v1277, %v1281
        %v1284 = vmul.f32 %v250, 2.0
        %v1285 = vmul.f32 %v251, 2.0
        %v1286 = vadd.f32 %v1282, %v1284
        %v1287 = vadd.f32 %v1283, %v1285
        %1288 = vst [vmem:[%s244] sm:$0xff] %v1286
        %1289 = vst [vmem:[%s244 + $0x8] sm:$0xff] %v1287
        %s1290 = sand.u32 %s159, 1
        %s1291 = scalar_lea.sflag [#allocation3], %s1290
        %s1292 = sand.u32 %s159, 1
        %s1293 = smul.addr %s1292, 16
        %s1294 = scalar_lea.vmem [#allocation2], %s1293
        // Predicated region
        $region45: #{tpu_custom_call.1} parent=43 // pred_check
          %p1295 = pneg %p169
        $region46: #{tpu_custom_call.1} parent=43 // pred_check_branch
          %1297 = sbr.rel (%p1295) target = $region48
        $region47: #{tpu_custom_call.1} parent=43 // pred_region
          %s1299 = ssub.s32 256, 256
          %1300 = vsyncadd %s1291, %s1299
          %s1301 = smul.addr %s20, 2
          %s1302 = smul.addr %s1301, 128
          %s1303 = scalar_lea.hbm %s6, %s1302
          %s1305 = sshll.u32 %s1294, 4
          %s1306 = int_to_ptr.vmem [resolvable:$true] %s1305
          %1308 = dma.vmem_to_hbm [thread:$0]  %s1306, 256, %s1303, %s1291
        $region48: #{tpu_custom_call.1} parent=43 // pred_fallthru
          _
      $region44: #{tpu_custom_call.1} parent=5 // pred_fallthru
        _
      %p1309 = scmp.le.s32.totalorder 2, %s15
      // Predicated region
      $region49: #{tpu_custom_call.1} parent=5 // pred_check
        %p1310 = pneg %p1309
      $region50: #{tpu_custom_call.1} parent=5 // pred_check_branch
        %1312 = sbr.rel (%p1310) target = $region52
      $region51: #{tpu_custom_call.1} parent=5 // pred_region
        %s1313 = ssub.s32 %s15, 2
        // Predicated region
        $region53: #{tpu_custom_call.1} parent=51 // pred_check
          %p1314 = pneg %p175
        $region54: #{tpu_custom_call.1} parent=51 // pred_check_branch
          %1316 = sbr.rel (%p1314) target = $region56
        $region55: #{tpu_custom_call.1} parent=51 // pred_region
          %s1317 = sand.u32 %s160, 1
          %s1318 = scalar_lea.sflag [#allocation3], %s1317
          %s1319 = sand.u32 %s160, 1
          %s1320 = smul.addr %s1319, 16
          %s1321 = scalar_lea.vmem [#allocation2], %s1320
          %1322 = dma.done %s1318, 256
        $region56: #{tpu_custom_call.1} parent=51 // pred_fallthru
          _
      $region52: #{tpu_custom_call.1} parent=5 // pred_fallthru
        _
    $region6: #{tpu_custom_call.1} parent=1 // loop_footer
      %s19 = sadd.s32 1, %s15
    $region7: #{tpu_custom_call.1} parent=1 // loop_footer_branch
      %14 = sbr.rel target = $region3
    $region8: #{tpu_custom_call.1} parent=1 // loop_exit
      _
    %1323 = vsyncpa [#allocation3], 1
    %s1324 = scalar_lea.sflag [#allocation3], 1
    %1325 = vsyncpa %s1324, 1

</llo_original>
